<compile_context>
chip_gen: v7x
topology: tpu7x:2x2x1
jax: 0.10.0
libtpu: 0.0.40
codegen_flags: <defaults>
</compile_context>

<pallas_src>
import jax
import jax.numpy as jnp
from jax import lax
from jax.experimental import pallas as pl
from jax.experimental.pallas import tpu as pltpu

# Problem sizes from the torch module (batch is free; example below uses 4).
C_IN, H, W = 2, 20, 20
C_OUT, KH, KW = 3, 3, 3
OH, OW = H - KH + 1, W - KW + 1          # 18, 18  (stride 1, no padding)
WPAD = 128                               # lane-dense padded width


def conv2d_kernel(x_ref, w_ref, b_ref, o_ref):
    """Direct conv as VPU broadcast-FMAs; NB samples per grid step.

    x_ref: (NB, C_IN, H, WPAD)      f32, VMEM (NCHW, W zero-padded to 128 lanes)
    w_ref: (C_OUT*C_IN*KH*KW,)      f32, SMEM (flattened OIHW weights)
    b_ref: (C_OUT,)                 f32, SMEM
    o_ref: (NB, C_OUT, OH, WPAD)    f32, VMEM (lanes >= OW are don't-care)
    """
    nb = x_ref.shape[0]
    for b in range(nb):
        # Per-(co, kw) accumulators at full lane width: 9 x (18, 128) ~ 27 vregs.
        accs = [[jnp.zeros((OH, WPAD), jnp.float32) for _ in range(KW)]
                for _ in range(C_OUT)]
        # Slice only along kh (sublane shift) at full lane width; no lane
        # shifts inside the accumulation loops.
        for ci in range(C_IN):
            for kh in range(KH):
                slab = x_ref[b, ci, kh:kh + OH, :]            # (OH, WPAD)
                for co in range(C_OUT):
                    for kw in range(KW):
                        widx = ((co * C_IN + ci) * KH + kh) * KW + kw
                        accs[co][kw] = accs[co][kw] + slab * w_ref[widx]
        # kw lane alignment once per output channel: 2 circular rolls per co
        # (6 XLU rolls total), then one unmasked 128-lane store per (b, co).
        for co in range(C_OUT):
            out = accs[co][0] + b_ref[co]
            for kw in range(1, KW):
                out = out + pltpu.roll(accs[co][kw], shift=WPAD - kw, axis=1)
            o_ref[b, co, :, :] = out


def conv2d_pallas(x_nchw, w_oihw, bias):
    """NCHW conv2d, stride 1, 'valid'.  x: (N, C_IN, H, W) -> (N, C_OUT, OH, OW)."""
    n = x_nchw.shape[0]
    nb = 2 if n % 2 == 0 else 1          # samples per grid step
    x = x_nchw.astype(jnp.float32)
    # Zero-pad W to the 128-lane width once in the wrapper so every in-kernel
    # slab read and output store is lane-dense.
    x_pad = jnp.pad(x, ((0, 0), (0, 0), (0, 0), (0, WPAD - W)))
    w_flat = w_oihw.astype(jnp.float32).reshape(-1)            # (54,)
    b = bias.astype(jnp.float32)                               # (3,)

    cost = pl.CostEstimate(
        flops=2 * n * OH * OW * C_OUT * C_IN * KH * KW,
        transcendentals=0,
        bytes_accessed=(x_pad.size + w_flat.size + b.size
                        + n * C_OUT * OH * WPAD) * 4)

    out_pad = pl.pallas_call(
        conv2d_kernel,
        out_shape=jax.ShapeDtypeStruct((n, C_OUT, OH, WPAD), jnp.float32),
        grid=(n // nb,),
        in_specs=[
            pl.BlockSpec((nb, C_IN, H, WPAD), lambda i: (i, 0, 0, 0)),
            pl.BlockSpec((C_OUT * C_IN * KH * KW,), lambda i: (0,),
                         memory_space=pltpu.MemorySpace.SMEM),
            pl.BlockSpec((C_OUT,), lambda i: (0,),
                         memory_space=pltpu.MemorySpace.SMEM),
        ],
        out_specs=pl.BlockSpec((nb, C_OUT, OH, WPAD), lambda i: (i, 0, 0, 0)),
        compiler_params=pltpu.CompilerParams(
            dimension_semantics=("parallel",)),   # batch steps -> both v7x TCs
        cost_estimate=cost,
    )(x_pad, w_flat, b)
    # Drop the lane padding (valid output columns only).
    return out_pad[..., :OW]


def init_params(key):
    """Deterministic init mimicking torch.nn.Conv2d default (uniform(-k, k))."""
    k_w, k_b = jax.random.split(key)
    fan_in = C_IN * KH * KW
    bound = 1.0 / jnp.sqrt(jnp.float32(fan_in))
    w_oihw = jax.random.uniform(k_w, (C_OUT, C_IN, KH, KW),
                                minval=-bound, maxval=bound, dtype=jnp.float32)
    bias = jax.random.uniform(k_b, (C_OUT,), minval=-bound, maxval=bound,
                              dtype=jnp.float32)
    return w_oihw, bias


if __name__ == "__main__":
    key = jax.random.PRNGKey(0)
    k_x, k_p = jax.random.split(key)

    # Batched call (amortizes pallas_call dispatch; 2 grid steps of 2 samples).
    N = 4
    x = jax.random.normal(k_x, (N, C_IN, H, W), dtype=jnp.float32)
    w_oihw, bias = init_params(k_p)

    out = conv2d_pallas(x, w_oihw, bias)
    out = jax.block_until_ready(out)
    assert out.shape == (N, C_OUT, OH, OW), out.shape

    # Cross-check against XLA's native conv (NCHW / OIHW).
    ref = lax.conv_general_dilated(
        x, w_oihw, window_strides=(1, 1), padding="VALID",
        dimension_numbers=("NCHW", "OIHW", "NCHW"))
    ref = ref + bias.reshape(1, C_OUT, 1, 1)
    assert jnp.allclose(out, ref, atol=1e-5, rtol=1e-5), (
        float(jnp.max(jnp.abs(out - ref))))

    print("KERNEL_OK")
</pallas_src>

<mosaic_0001>
module attributes {stable_mosaic.version = 11 : i64} {
  func.func @conv2d_kernel(%arg0: i32, %arg1: memref<2x2x20x128xf32, #tpu.memory_space<vmem>>, %arg2: memref<54xf32, #tpu.memory_space<smem>>, %arg3: memref<3xf32, #tpu.memory_space<smem>>, %arg4: memref<2x3x18x128xf32, #tpu.memory_space<vmem>>) attributes {dimension_semantics = [#tpu.dimension_semantics<parallel>], iteration_bounds = array<i64: 2>, scalar_prefetch = 0 : i64, scratch_operands = 0 : i64, tpu.core_type = #tpu.core_type<tc>, window_params = [{transform_indices = @transform_0, window_bounds = array<i64: 2, 2, 20, 128>}, {transform_indices = @transform_1, window_bounds = array<i64: 54>}, {transform_indices = @transform_2, window_bounds = array<i64: 3>}, {transform_indices = @transform_3, window_bounds = array<i64: 2, 3, 18, 128>}]} {
    %cst = arith.constant 0.000000e+00 : f32
    %0 = vector.broadcast %cst : f32 to vector<18x128xf32>
    %cst_0 = arith.constant 0.000000e+00 : f32
    %1 = vector.broadcast %cst_0 : f32 to vector<18x128xf32>
    %cst_1 = arith.constant 0.000000e+00 : f32
    %2 = vector.broadcast %cst_1 : f32 to vector<18x128xf32>
    %cst_2 = arith.constant 0.000000e+00 : f32
    %3 = vector.broadcast %cst_2 : f32 to vector<18x128xf32>
    %cst_3 = arith.constant 0.000000e+00 : f32
    %4 = vector.broadcast %cst_3 : f32 to vector<18x128xf32>
    %cst_4 = arith.constant 0.000000e+00 : f32
    %5 = vector.broadcast %cst_4 : f32 to vector<18x128xf32>
    %cst_5 = arith.constant 0.000000e+00 : f32
    %6 = vector.broadcast %cst_5 : f32 to vector<18x128xf32>
    %cst_6 = arith.constant 0.000000e+00 : f32
    %7 = vector.broadcast %cst_6 : f32 to vector<18x128xf32>
    %cst_7 = arith.constant 0.000000e+00 : f32
    %8 = vector.broadcast %cst_7 : f32 to vector<18x128xf32>
    %c0 = arith.constant 0 : index
    %c0_8 = arith.constant 0 : index
    %c0_9 = arith.constant 0 : index
    %c0_10 = arith.constant 0 : index
    %9 = vector.load %arg1[%c0, %c0_8, %c0_9, %c0_10] : memref<2x2x20x128xf32, #tpu.memory_space<vmem>>, vector<1x1x18x128xf32>
    %10 = vector.shape_cast %9 : vector<1x1x18x128xf32> to vector<18x128xf32>
    %c0_11 = arith.constant 0 : index
    %11 = memref.load %arg2[%c0_11] : memref<54xf32, #tpu.memory_space<smem>>
    %12 = vector.broadcast %11 : f32 to vector<18x128xf32>
    %13 = arith.mulf %10, %12 : vector<18x128xf32>
    %14 = arith.addf %0, %13 : vector<18x128xf32>
    %c1 = arith.constant 1 : index
    %15 = memref.load %arg2[%c1] : memref<54xf32, #tpu.memory_space<smem>>
    %16 = vector.broadcast %15 : f32 to vector<18x128xf32>
    %17 = arith.mulf %10, %16 : vector<18x128xf32>
    %18 = arith.addf %1, %17 : vector<18x128xf32>
    %c2 = arith.constant 2 : index
    %19 = memref.load %arg2[%c2] : memref<54xf32, #tpu.memory_space<smem>>
    %20 = vector.broadcast %19 : f32 to vector<18x128xf32>
    %21 = arith.mulf %10, %20 : vector<18x128xf32>
    %22 = arith.addf %2, %21 : vector<18x128xf32>
    %c18 = arith.constant 18 : index
    %23 = memref.load %arg2[%c18] : memref<54xf32, #tpu.memory_space<smem>>
    %24 = vector.broadcast %23 : f32 to vector<18x128xf32>
    %25 = arith.mulf %10, %24 : vector<18x128xf32>
    %26 = arith.addf %3, %25 : vector<18x128xf32>
    %c19 = arith.constant 19 : index
    %27 = memref.load %arg2[%c19] : memref<54xf32, #tpu.memory_space<smem>>
    %28 = vector.broadcast %27 : f32 to vector<18x128xf32>
    %29 = arith.mulf %10, %28 : vector<18x128xf32>
    %30 = arith.addf %4, %29 : vector<18x128xf32>
    %c20 = arith.constant 20 : index
    %31 = memref.load %arg2[%c20] : memref<54xf32, #tpu.memory_space<smem>>
    %32 = vector.broadcast %31 : f32 to vector<18x128xf32>
    %33 = arith.mulf %10, %32 : vector<18x128xf32>
    %34 = arith.addf %5, %33 : vector<18x128xf32>
    %c36 = arith.constant 36 : index
    %35 = memref.load %arg2[%c36] : memref<54xf32, #tpu.memory_space<smem>>
    %36 = vector.broadcast %35 : f32 to vector<18x128xf32>
    %37 = arith.mulf %10, %36 : vector<18x128xf32>
    %38 = arith.addf %6, %37 : vector<18x128xf32>
    %c37 = arith.constant 37 : index
    %39 = memref.load %arg2[%c37] : memref<54xf32, #tpu.memory_space<smem>>
    %40 = vector.broadcast %39 : f32 to vector<18x128xf32>
    %41 = arith.mulf %10, %40 : vector<18x128xf32>
    %42 = arith.addf %7, %41 : vector<18x128xf32>
    %c38 = arith.constant 38 : index
    %43 = memref.load %arg2[%c38] : memref<54xf32, #tpu.memory_space<smem>>
    %44 = vector.broadcast %43 : f32 to vector<18x128xf32>
    %45 = arith.mulf %10, %44 : vector<18x128xf32>
    %46 = arith.addf %8, %45 : vector<18x128xf32>
    %c0_12 = arith.constant 0 : index
    %c0_13 = arith.constant 0 : index
    %c1_14 = arith.constant 1 : index
    %c0_15 = arith.constant 0 : index
    %47 = vector.load %arg1[%c0_12, %c0_13, %c1_14, %c0_15] : memref<2x2x20x128xf32, #tpu.memory_space<vmem>>, vector<1x1x18x128xf32>
    %48 = vector.shape_cast %47 : vector<1x1x18x128xf32> to vector<18x128xf32>
    %c3 = arith.constant 3 : index
    %49 = memref.load %arg2[%c3] : memref<54xf32, #tpu.memory_space<smem>>
    %50 = vector.broadcast %49 : f32 to vector<18x128xf32>
    %51 = arith.mulf %48, %50 : vector<18x128xf32>
    %52 = arith.addf %14, %51 : vector<18x128xf32>
    %c4 = arith.constant 4 : index
    %53 = memref.load %arg2[%c4] : memref<54xf32, #tpu.memory_space<smem>>
    %54 = vector.broadcast %53 : f32 to vector<18x128xf32>
    %55 = arith.mulf %48, %54 : vector<18x128xf32>
    %56 = arith.addf %18, %55 : vector<18x128xf32>
    %c5 = arith.constant 5 : index
    %57 = memref.load %arg2[%c5] : memref<54xf32, #tpu.memory_space<smem>>
    %58 = vector.broadcast %57 : f32 to vector<18x128xf32>
    %59 = arith.mulf %48, %58 : vector<18x128xf32>
    %60 = arith.addf %22, %59 : vector<18x128xf32>
    %c21 = arith.constant 21 : index
    %61 = memref.load %arg2[%c21] : memref<54xf32, #tpu.memory_space<smem>>
    %62 = vector.broadcast %61 : f32 to vector<18x128xf32>
    %63 = arith.mulf %48, %62 : vector<18x128xf32>
    %64 = arith.addf %26, %63 : vector<18x128xf32>
    %c22 = arith.constant 22 : index
    %65 = memref.load %arg2[%c22] : memref<54xf32, #tpu.memory_space<smem>>
    %66 = vector.broadcast %65 : f32 to vector<18x128xf32>
    %67 = arith.mulf %48, %66 : vector<18x128xf32>
    %68 = arith.addf %30, %67 : vector<18x128xf32>
    %c23 = arith.constant 23 : index
    %69 = memref.load %arg2[%c23] : memref<54xf32, #tpu.memory_space<smem>>
    %70 = vector.broadcast %69 : f32 to vector<18x128xf32>
    %71 = arith.mulf %48, %70 : vector<18x128xf32>
    %72 = arith.addf %34, %71 : vector<18x128xf32>
    %c39 = arith.constant 39 : index
    %73 = memref.load %arg2[%c39] : memref<54xf32, #tpu.memory_space<smem>>
    %74 = vector.broadcast %73 : f32 to vector<18x128xf32>
    %75 = arith.mulf %48, %74 : vector<18x128xf32>
    %76 = arith.addf %38, %75 : vector<18x128xf32>
    %c40 = arith.constant 40 : index
    %77 = memref.load %arg2[%c40] : memref<54xf32, #tpu.memory_space<smem>>
    %78 = vector.broadcast %77 : f32 to vector<18x128xf32>
    %79 = arith.mulf %48, %78 : vector<18x128xf32>
    %80 = arith.addf %42, %79 : vector<18x128xf32>
    %c41 = arith.constant 41 : index
    %81 = memref.load %arg2[%c41] : memref<54xf32, #tpu.memory_space<smem>>
    %82 = vector.broadcast %81 : f32 to vector<18x128xf32>
    %83 = arith.mulf %48, %82 : vector<18x128xf32>
    %84 = arith.addf %46, %83 : vector<18x128xf32>
    %c0_16 = arith.constant 0 : index
    %c0_17 = arith.constant 0 : index
    %c2_18 = arith.constant 2 : index
    %c0_19 = arith.constant 0 : index
    %85 = vector.load %arg1[%c0_16, %c0_17, %c2_18, %c0_19] : memref<2x2x20x128xf32, #tpu.memory_space<vmem>>, vector<1x1x18x128xf32>
    %86 = vector.shape_cast %85 : vector<1x1x18x128xf32> to vector<18x128xf32>
    %c6 = arith.constant 6 : index
    %87 = memref.load %arg2[%c6] : memref<54xf32, #tpu.memory_space<smem>>
    %88 = vector.broadcast %87 : f32 to vector<18x128xf32>
    %89 = arith.mulf %86, %88 : vector<18x128xf32>
    %90 = arith.addf %52, %89 : vector<18x128xf32>
    %c7 = arith.constant 7 : index
    %91 = memref.load %arg2[%c7] : memref<54xf32, #tpu.memory_space<smem>>
    %92 = vector.broadcast %91 : f32 to vector<18x128xf32>
    %93 = arith.mulf %86, %92 : vector<18x128xf32>
    %94 = arith.addf %56, %93 : vector<18x128xf32>
    %c8 = arith.constant 8 : index
    %95 = memref.load %arg2[%c8] : memref<54xf32, #tpu.memory_space<smem>>
    %96 = vector.broadcast %95 : f32 to vector<18x128xf32>
    %97 = arith.mulf %86, %96 : vector<18x128xf32>
    %98 = arith.addf %60, %97 : vector<18x128xf32>
    %c24 = arith.constant 24 : index
    %99 = memref.load %arg2[%c24] : memref<54xf32, #tpu.memory_space<smem>>
    %100 = vector.broadcast %99 : f32 to vector<18x128xf32>
    %101 = arith.mulf %86, %100 : vector<18x128xf32>
    %102 = arith.addf %64, %101 : vector<18x128xf32>
    %c25 = arith.constant 25 : index
    %103 = memref.load %arg2[%c25] : memref<54xf32, #tpu.memory_space<smem>>
    %104 = vector.broadcast %103 : f32 to vector<18x128xf32>
    %105 = arith.mulf %86, %104 : vector<18x128xf32>
    %106 = arith.addf %68, %105 : vector<18x128xf32>
    %c26 = arith.constant 26 : index
    %107 = memref.load %arg2[%c26] : memref<54xf32, #tpu.memory_space<smem>>
    %108 = vector.broadcast %107 : f32 to vector<18x128xf32>
    %109 = arith.mulf %86, %108 : vector<18x128xf32>
    %110 = arith.addf %72, %109 : vector<18x128xf32>
    %c42 = arith.constant 42 : index
    %111 = memref.load %arg2[%c42] : memref<54xf32, #tpu.memory_space<smem>>
    %112 = vector.broadcast %111 : f32 to vector<18x128xf32>
    %113 = arith.mulf %86, %112 : vector<18x128xf32>
    %114 = arith.addf %76, %113 : vector<18x128xf32>
    %c43 = arith.constant 43 : index
    %115 = memref.load %arg2[%c43] : memref<54xf32, #tpu.memory_space<smem>>
    %116 = vector.broadcast %115 : f32 to vector<18x128xf32>
    %117 = arith.mulf %86, %116 : vector<18x128xf32>
    %118 = arith.addf %80, %117 : vector<18x128xf32>
    %c44 = arith.constant 44 : index
    %119 = memref.load %arg2[%c44] : memref<54xf32, #tpu.memory_space<smem>>
    %120 = vector.broadcast %119 : f32 to vector<18x128xf32>
    %121 = arith.mulf %86, %120 : vector<18x128xf32>
    %122 = arith.addf %84, %121 : vector<18x128xf32>
    %c0_20 = arith.constant 0 : index
    %c1_21 = arith.constant 1 : index
    %c0_22 = arith.constant 0 : index
    %c0_23 = arith.constant 0 : index
    %123 = vector.load %arg1[%c0_20, %c1_21, %c0_22, %c0_23] : memref<2x2x20x128xf32, #tpu.memory_space<vmem>>, vector<1x1x18x128xf32>
    %124 = vector.shape_cast %123 : vector<1x1x18x128xf32> to vector<18x128xf32>
    %c9 = arith.constant 9 : index
    %125 = memref.load %arg2[%c9] : memref<54xf32, #tpu.memory_space<smem>>
    %126 = vector.broadcast %125 : f32 to vector<18x128xf32>
    %127 = arith.mulf %124, %126 : vector<18x128xf32>
    %128 = arith.addf %90, %127 : vector<18x128xf32>
    %c10 = arith.constant 10 : index
    %129 = memref.load %arg2[%c10] : memref<54xf32, #tpu.memory_space<smem>>
    %130 = vector.broadcast %129 : f32 to vector<18x128xf32>
    %131 = arith.mulf %124, %130 : vector<18x128xf32>
    %132 = arith.addf %94, %131 : vector<18x128xf32>
    %c11 = arith.constant 11 : index
    %133 = memref.load %arg2[%c11] : memref<54xf32, #tpu.memory_space<smem>>
    %134 = vector.broadcast %133 : f32 to vector<18x128xf32>
    %135 = arith.mulf %124, %134 : vector<18x128xf32>
    %136 = arith.addf %98, %135 : vector<18x128xf32>
    %c27 = arith.constant 27 : index
    %137 = memref.load %arg2[%c27] : memref<54xf32, #tpu.memory_space<smem>>
    %138 = vector.broadcast %137 : f32 to vector<18x128xf32>
    %139 = arith.mulf %124, %138 : vector<18x128xf32>
    %140 = arith.addf %102, %139 : vector<18x128xf32>
    %c28 = arith.constant 28 : index
    %141 = memref.load %arg2[%c28] : memref<54xf32, #tpu.memory_space<smem>>
    %142 = vector.broadcast %141 : f32 to vector<18x128xf32>
    %143 = arith.mulf %124, %142 : vector<18x128xf32>
    %144 = arith.addf %106, %143 : vector<18x128xf32>
    %c29 = arith.constant 29 : index
    %145 = memref.load %arg2[%c29] : memref<54xf32, #tpu.memory_space<smem>>
    %146 = vector.broadcast %145 : f32 to vector<18x128xf32>
    %147 = arith.mulf %124, %146 : vector<18x128xf32>
    %148 = arith.addf %110, %147 : vector<18x128xf32>
    %c45 = arith.constant 45 : index
    %149 = memref.load %arg2[%c45] : memref<54xf32, #tpu.memory_space<smem>>
    %150 = vector.broadcast %149 : f32 to vector<18x128xf32>
    %151 = arith.mulf %124, %150 : vector<18x128xf32>
    %152 = arith.addf %114, %151 : vector<18x128xf32>
    %c46 = arith.constant 46 : index
    %153 = memref.load %arg2[%c46] : memref<54xf32, #tpu.memory_space<smem>>
    %154 = vector.broadcast %153 : f32 to vector<18x128xf32>
    %155 = arith.mulf %124, %154 : vector<18x128xf32>
    %156 = arith.addf %118, %155 : vector<18x128xf32>
    %c47 = arith.constant 47 : index
    %157 = memref.load %arg2[%c47] : memref<54xf32, #tpu.memory_space<smem>>
    %158 = vector.broadcast %157 : f32 to vector<18x128xf32>
    %159 = arith.mulf %124, %158 : vector<18x128xf32>
    %160 = arith.addf %122, %159 : vector<18x128xf32>
    %c0_24 = arith.constant 0 : index
    %c1_25 = arith.constant 1 : index
    %c1_26 = arith.constant 1 : index
    %c0_27 = arith.constant 0 : index
    %161 = vector.load %arg1[%c0_24, %c1_25, %c1_26, %c0_27] : memref<2x2x20x128xf32, #tpu.memory_space<vmem>>, vector<1x1x18x128xf32>
    %162 = vector.shape_cast %161 : vector<1x1x18x128xf32> to vector<18x128xf32>
    %c12 = arith.constant 12 : index
    %163 = memref.load %arg2[%c12] : memref<54xf32, #tpu.memory_space<smem>>
    %164 = vector.broadcast %163 : f32 to vector<18x128xf32>
    %165 = arith.mulf %162, %164 : vector<18x128xf32>
    %166 = arith.addf %128, %165 : vector<18x128xf32>
    %c13 = arith.constant 13 : index
    %167 = memref.load %arg2[%c13] : memref<54xf32, #tpu.memory_space<smem>>
    %168 = vector.broadcast %167 : f32 to vector<18x128xf32>
    %169 = arith.mulf %162, %168 : vector<18x128xf32>
    %170 = arith.addf %132, %169 : vector<18x128xf32>
    %c14 = arith.constant 14 : index
    %171 = memref.load %arg2[%c14] : memref<54xf32, #tpu.memory_space<smem>>
    %172 = vector.broadcast %171 : f32 to vector<18x128xf32>
    %173 = arith.mulf %162, %172 : vector<18x128xf32>
    %174 = arith.addf %136, %173 : vector<18x128xf32>
    %c30 = arith.constant 30 : index
    %175 = memref.load %arg2[%c30] : memref<54xf32, #tpu.memory_space<smem>>
    %176 = vector.broadcast %175 : f32 to vector<18x128xf32>
    %177 = arith.mulf %162, %176 : vector<18x128xf32>
    %178 = arith.addf %140, %177 : vector<18x128xf32>
    %c31 = arith.constant 31 : index
    %179 = memref.load %arg2[%c31] : memref<54xf32, #tpu.memory_space<smem>>
    %180 = vector.broadcast %179 : f32 to vector<18x128xf32>
    %181 = arith.mulf %162, %180 : vector<18x128xf32>
    %182 = arith.addf %144, %181 : vector<18x128xf32>
    %c32 = arith.constant 32 : index
    %183 = memref.load %arg2[%c32] : memref<54xf32, #tpu.memory_space<smem>>
    %184 = vector.broadcast %183 : f32 to vector<18x128xf32>
    %185 = arith.mulf %162, %184 : vector<18x128xf32>
    %186 = arith.addf %148, %185 : vector<18x128xf32>
    %c48 = arith.constant 48 : index
    %187 = memref.load %arg2[%c48] : memref<54xf32, #tpu.memory_space<smem>>
    %188 = vector.broadcast %187 : f32 to vector<18x128xf32>
    %189 = arith.mulf %162, %188 : vector<18x128xf32>
    %190 = arith.addf %152, %189 : vector<18x128xf32>
    %c49 = arith.constant 49 : index
    %191 = memref.load %arg2[%c49] : memref<54xf32, #tpu.memory_space<smem>>
    %192 = vector.broadcast %191 : f32 to vector<18x128xf32>
    %193 = arith.mulf %162, %192 : vector<18x128xf32>
    %194 = arith.addf %156, %193 : vector<18x128xf32>
    %c50 = arith.constant 50 : index
    %195 = memref.load %arg2[%c50] : memref<54xf32, #tpu.memory_space<smem>>
    %196 = vector.broadcast %195 : f32 to vector<18x128xf32>
    %197 = arith.mulf %162, %196 : vector<18x128xf32>
    %198 = arith.addf %160, %197 : vector<18x128xf32>
    %c0_28 = arith.constant 0 : index
    %c1_29 = arith.constant 1 : index
    %c2_30 = arith.constant 2 : index
    %c0_31 = arith.constant 0 : index
    %199 = vector.load %arg1[%c0_28, %c1_29, %c2_30, %c0_31] : memref<2x2x20x128xf32, #tpu.memory_space<vmem>>, vector<1x1x18x128xf32>
    %200 = vector.shape_cast %199 : vector<1x1x18x128xf32> to vector<18x128xf32>
    %c15 = arith.constant 15 : index
    %201 = memref.load %arg2[%c15] : memref<54xf32, #tpu.memory_space<smem>>
    %202 = vector.broadcast %201 : f32 to vector<18x128xf32>
    %203 = arith.mulf %200, %202 : vector<18x128xf32>
    %204 = arith.addf %166, %203 : vector<18x128xf32>
    %c16 = arith.constant 16 : index
    %205 = memref.load %arg2[%c16] : memref<54xf32, #tpu.memory_space<smem>>
    %206 = vector.broadcast %205 : f32 to vector<18x128xf32>
    %207 = arith.mulf %200, %206 : vector<18x128xf32>
    %208 = arith.addf %170, %207 : vector<18x128xf32>
    %c17 = arith.constant 17 : index
    %209 = memref.load %arg2[%c17] : memref<54xf32, #tpu.memory_space<smem>>
    %210 = vector.broadcast %209 : f32 to vector<18x128xf32>
    %211 = arith.mulf %200, %210 : vector<18x128xf32>
    %212 = arith.addf %174, %211 : vector<18x128xf32>
    %c33 = arith.constant 33 : index
    %213 = memref.load %arg2[%c33] : memref<54xf32, #tpu.memory_space<smem>>
    %214 = vector.broadcast %213 : f32 to vector<18x128xf32>
    %215 = arith.mulf %200, %214 : vector<18x128xf32>
    %216 = arith.addf %178, %215 : vector<18x128xf32>
    %c34 = arith.constant 34 : index
    %217 = memref.load %arg2[%c34] : memref<54xf32, #tpu.memory_space<smem>>
    %218 = vector.broadcast %217 : f32 to vector<18x128xf32>
    %219 = arith.mulf %200, %218 : vector<18x128xf32>
    %220 = arith.addf %182, %219 : vector<18x128xf32>
    %c35 = arith.constant 35 : index
    %221 = memref.load %arg2[%c35] : memref<54xf32, #tpu.memory_space<smem>>
    %222 = vector.broadcast %221 : f32 to vector<18x128xf32>
    %223 = arith.mulf %200, %222 : vector<18x128xf32>
    %224 = arith.addf %186, %223 : vector<18x128xf32>
    %c51 = arith.constant 51 : index
    %225 = memref.load %arg2[%c51] : memref<54xf32, #tpu.memory_space<smem>>
    %226 = vector.broadcast %225 : f32 to vector<18x128xf32>
    %227 = arith.mulf %200, %226 : vector<18x128xf32>
    %228 = arith.addf %190, %227 : vector<18x128xf32>
    %c52 = arith.constant 52 : index
    %229 = memref.load %arg2[%c52] : memref<54xf32, #tpu.memory_space<smem>>
    %230 = vector.broadcast %229 : f32 to vector<18x128xf32>
    %231 = arith.mulf %200, %230 : vector<18x128xf32>
    %232 = arith.addf %194, %231 : vector<18x128xf32>
    %c53 = arith.constant 53 : index
    %233 = memref.load %arg2[%c53] : memref<54xf32, #tpu.memory_space<smem>>
    %234 = vector.broadcast %233 : f32 to vector<18x128xf32>
    %235 = arith.mulf %200, %234 : vector<18x128xf32>
    %236 = arith.addf %198, %235 : vector<18x128xf32>
    %c0_32 = arith.constant 0 : index
    %237 = memref.load %arg3[%c0_32] : memref<3xf32, #tpu.memory_space<smem>>
    %238 = vector.broadcast %237 : f32 to vector<18x128xf32>
    %239 = arith.addf %204, %238 : vector<18x128xf32>
    %c127_i32 = arith.constant 127 : i32
    %240 = tpu.dynamic_rotate %208 by %c127_i32 dim 1 : vector<18x128xf32>, i32 -> vector<18x128xf32>
    %241 = arith.addf %239, %240 : vector<18x128xf32>
    %c126_i32 = arith.constant 126 : i32
    %242 = tpu.dynamic_rotate %212 by %c126_i32 dim 1 : vector<18x128xf32>, i32 -> vector<18x128xf32>
    %243 = arith.addf %241, %242 : vector<18x128xf32>
    %c0_33 = arith.constant 0 : index
    %c0_34 = arith.constant 0 : index
    %c0_35 = arith.constant 0 : index
    %c0_36 = arith.constant 0 : index
    %244 = vector.load %arg4[%c0_33, %c0_34, %c0_35, %c0_36] : memref<2x3x18x128xf32, #tpu.memory_space<vmem>>, vector<1x1x18x128xf32>
    %245 = vector.shape_cast %244 : vector<1x1x18x128xf32> to vector<18x128xf32>
    %246 = vector.shape_cast %243 : vector<18x128xf32> to vector<1x1x18x128xf32>
    tpu.vector_store %arg4[%c0_33, %c0_34, %c0_35, %c0_36], %246 {strides = array<i32>} : memref<2x3x18x128xf32, #tpu.memory_space<vmem>>, vector<1x1x18x128xf32>,
    %c1_37 = arith.constant 1 : index
    %247 = memref.load %arg3[%c1_37] : memref<3xf32, #tpu.memory_space<smem>>
    %248 = vector.broadcast %247 : f32 to vector<18x128xf32>
    %249 = arith.addf %216, %248 : vector<18x128xf32>
    %c127_i32_38 = arith.constant 127 : i32
    %250 = tpu.dynamic_rotate %220 by %c127_i32_38 dim 1 : vector<18x128xf32>, i32 -> vector<18x128xf32>
    %251 = arith.addf %249, %250 : vector<18x128xf32>
    %c126_i32_39 = arith.constant 126 : i32
    %252 = tpu.dynamic_rotate %224 by %c126_i32_39 dim 1 : vector<18x128xf32>, i32 -> vector<18x128xf32>
    %253 = arith.addf %251, %252 : vector<18x128xf32>
    %c0_40 = arith.constant 0 : index
    %c1_41 = arith.constant 1 : index
    %c0_42 = arith.constant 0 : index
    %c0_43 = arith.constant 0 : index
    %254 = vector.load %arg4[%c0_40, %c1_41, %c0_42, %c0_43] : memref<2x3x18x128xf32, #tpu.memory_space<vmem>>, vector<1x1x18x128xf32>
    %255 = vector.shape_cast %254 : vector<1x1x18x128xf32> to vector<18x128xf32>
    %256 = vector.shape_cast %253 : vector<18x128xf32> to vector<1x1x18x128xf32>
    tpu.vector_store %arg4[%c0_40, %c1_41, %c0_42, %c0_43], %256 {strides = array<i32>} : memref<2x3x18x128xf32, #tpu.memory_space<vmem>>, vector<1x1x18x128xf32>,
    %c2_44 = arith.constant 2 : index
    %257 = memref.load %arg3[%c2_44] : memref<3xf32, #tpu.memory_space<smem>>
    %258 = vector.broadcast %257 : f32 to vector<18x128xf32>
    %259 = arith.addf %228, %258 : vector<18x128xf32>
    %c127_i32_45 = arith.constant 127 : i32
    %260 = tpu.dynamic_rotate %232 by %c127_i32_45 dim 1 : vector<18x128xf32>, i32 -> vector<18x128xf32>
    %261 = arith.addf %259, %260 : vector<18x128xf32>
    %c126_i32_46 = arith.constant 126 : i32
    %262 = tpu.dynamic_rotate %236 by %c126_i32_46 dim 1 : vector<18x128xf32>, i32 -> vector<18x128xf32>
    %263 = arith.addf %261, %262 : vector<18x128xf32>
    %c0_47 = arith.constant 0 : index
    %c2_48 = arith.constant 2 : index
    %c0_49 = arith.constant 0 : index
    %c0_50 = arith.constant 0 : index
    %264 = vector.load %arg4[%c0_47, %c2_48, %c0_49, %c0_50] : memref<2x3x18x128xf32, #tpu.memory_space<vmem>>, vector<1x1x18x128xf32>
    %265 = vector.shape_cast %264 : vector<1x1x18x128xf32> to vector<18x128xf32>
    %266 = vector.shape_cast %263 : vector<18x128xf32> to vector<1x1x18x128xf32>
    tpu.vector_store %arg4[%c0_47, %c2_48, %c0_49, %c0_50], %266 {strides = array<i32>} : memref<2x3x18x128xf32, #tpu.memory_space<vmem>>, vector<1x1x18x128xf32>,
    %cst_51 = arith.constant 0.000000e+00 : f32
    %267 = vector.broadcast %cst_51 : f32 to vector<18x128xf32>
    %cst_52 = arith.constant 0.000000e+00 : f32
    %268 = vector.broadcast %cst_52 : f32 to vector<18x128xf32>
    %cst_53 = arith.constant 0.000000e+00 : f32
    %269 = vector.broadcast %cst_53 : f32 to vector<18x128xf32>
    %cst_54 = arith.constant 0.000000e+00 : f32
    %270 = vector.broadcast %cst_54 : f32 to vector<18x128xf32>
    %cst_55 = arith.constant 0.000000e+00 : f32
    %271 = vector.broadcast %cst_55 : f32 to vector<18x128xf32>
    %cst_56 = arith.constant 0.000000e+00 : f32
    %272 = vector.broadcast %cst_56 : f32 to vector<18x128xf32>
    %cst_57 = arith.constant 0.000000e+00 : f32
    %273 = vector.broadcast %cst_57 : f32 to vector<18x128xf32>
    %cst_58 = arith.constant 0.000000e+00 : f32
    %274 = vector.broadcast %cst_58 : f32 to vector<18x128xf32>
    %cst_59 = arith.constant 0.000000e+00 : f32
    %275 = vector.broadcast %cst_59 : f32 to vector<18x128xf32>
    %c1_60 = arith.constant 1 : index
    %c0_61 = arith.constant 0 : index
    %c0_62 = arith.constant 0 : index
    %c0_63 = arith.constant 0 : index
    %276 = vector.load %arg1[%c1_60, %c0_61, %c0_62, %c0_63] : memref<2x2x20x128xf32, #tpu.memory_space<vmem>>, vector<1x1x18x128xf32>
    %277 = vector.shape_cast %276 : vector<1x1x18x128xf32> to vector<18x128xf32>
    %c0_64 = arith.constant 0 : index
    %278 = memref.load %arg2[%c0_64] : memref<54xf32, #tpu.memory_space<smem>>
    %279 = vector.broadcast %278 : f32 to vector<18x128xf32>
    %280 = arith.mulf %277, %279 : vector<18x128xf32>
    %281 = arith.addf %267, %280 : vector<18x128xf32>
    %c1_65 = arith.constant 1 : index
    %282 = memref.load %arg2[%c1_65] : memref<54xf32, #tpu.memory_space<smem>>
    %283 = vector.broadcast %282 : f32 to vector<18x128xf32>
    %284 = arith.mulf %277, %283 : vector<18x128xf32>
    %285 = arith.addf %268, %284 : vector<18x128xf32>
    %c2_66 = arith.constant 2 : index
    %286 = memref.load %arg2[%c2_66] : memref<54xf32, #tpu.memory_space<smem>>
    %287 = vector.broadcast %286 : f32 to vector<18x128xf32>
    %288 = arith.mulf %277, %287 : vector<18x128xf32>
    %289 = arith.addf %269, %288 : vector<18x128xf32>
    %c18_67 = arith.constant 18 : index
    %290 = memref.load %arg2[%c18_67] : memref<54xf32, #tpu.memory_space<smem>>
    %291 = vector.broadcast %290 : f32 to vector<18x128xf32>
    %292 = arith.mulf %277, %291 : vector<18x128xf32>
    %293 = arith.addf %270, %292 : vector<18x128xf32>
    %c19_68 = arith.constant 19 : index
    %294 = memref.load %arg2[%c19_68] : memref<54xf32, #tpu.memory_space<smem>>
    %295 = vector.broadcast %294 : f32 to vector<18x128xf32>
    %296 = arith.mulf %277, %295 : vector<18x128xf32>
    %297 = arith.addf %271, %296 : vector<18x128xf32>
    %c20_69 = arith.constant 20 : index
    %298 = memref.load %arg2[%c20_69] : memref<54xf32, #tpu.memory_space<smem>>
    %299 = vector.broadcast %298 : f32 to vector<18x128xf32>
    %300 = arith.mulf %277, %299 : vector<18x128xf32>
    %301 = arith.addf %272, %300 : vector<18x128xf32>
    %c36_70 = arith.constant 36 : index
    %302 = memref.load %arg2[%c36_70] : memref<54xf32, #tpu.memory_space<smem>>
    %303 = vector.broadcast %302 : f32 to vector<18x128xf32>
    %304 = arith.mulf %277, %303 : vector<18x128xf32>
    %305 = arith.addf %273, %304 : vector<18x128xf32>
    %c37_71 = arith.constant 37 : index
    %306 = memref.load %arg2[%c37_71] : memref<54xf32, #tpu.memory_space<smem>>
    %307 = vector.broadcast %306 : f32 to vector<18x128xf32>
    %308 = arith.mulf %277, %307 : vector<18x128xf32>
    %309 = arith.addf %274, %308 : vector<18x128xf32>
    %c38_72 = arith.constant 38 : index
    %310 = memref.load %arg2[%c38_72] : memref<54xf32, #tpu.memory_space<smem>>
    %311 = vector.broadcast %310 : f32 to vector<18x128xf32>
    %312 = arith.mulf %277, %311 : vector<18x128xf32>
    %313 = arith.addf %275, %312 : vector<18x128xf32>
    %c1_73 = arith.constant 1 : index
    %c0_74 = arith.constant 0 : index
    %c1_75 = arith.constant 1 : index
    %c0_76 = arith.constant 0 : index
    %314 = vector.load %arg1[%c1_73, %c0_74, %c1_75, %c0_76] : memref<2x2x20x128xf32, #tpu.memory_space<vmem>>, vector<1x1x18x128xf32>
    %315 = vector.shape_cast %314 : vector<1x1x18x128xf32> to vector<18x128xf32>
    %c3_77 = arith.constant 3 : index
    %316 = memref.load %arg2[%c3_77] : memref<54xf32, #tpu.memory_space<smem>>
    %317 = vector.broadcast %316 : f32 to vector<18x128xf32>
    %318 = arith.mulf %315, %317 : vector<18x128xf32>
    %319 = arith.addf %281, %318 : vector<18x128xf32>
    %c4_78 = arith.constant 4 : index
    %320 = memref.load %arg2[%c4_78] : memref<54xf32, #tpu.memory_space<smem>>
    %321 = vector.broadcast %320 : f32 to vector<18x128xf32>
    %322 = arith.mulf %315, %321 : vector<18x128xf32>
    %323 = arith.addf %285, %322 : vector<18x128xf32>
    %c5_79 = arith.constant 5 : index
    %324 = memref.load %arg2[%c5_79] : memref<54xf32, #tpu.memory_space<smem>>
    %325 = vector.broadcast %324 : f32 to vector<18x128xf32>
    %326 = arith.mulf %315, %325 : vector<18x128xf32>
    %327 = arith.addf %289, %326 : vector<18x128xf32>
    %c21_80 = arith.constant 21 : index
    %328 = memref.load %arg2[%c21_80] : memref<54xf32, #tpu.memory_space<smem>>
    %329 = vector.broadcast %328 : f32 to vector<18x128xf32>
    %330 = arith.mulf %315, %329 : vector<18x128xf32>
    %331 = arith.addf %293, %330 : vector<18x128xf32>
    %c22_81 = arith.constant 22 : index
    %332 = memref.load %arg2[%c22_81] : memref<54xf32, #tpu.memory_space<smem>>
    %333 = vector.broadcast %332 : f32 to vector<18x128xf32>
    %334 = arith.mulf %315, %333 : vector<18x128xf32>
    %335 = arith.addf %297, %334 : vector<18x128xf32>
    %c23_82 = arith.constant 23 : index
    %336 = memref.load %arg2[%c23_82] : memref<54xf32, #tpu.memory_space<smem>>
    %337 = vector.broadcast %336 : f32 to vector<18x128xf32>
    %338 = arith.mulf %315, %337 : vector<18x128xf32>
    %339 = arith.addf %301, %338 : vector<18x128xf32>
    %c39_83 = arith.constant 39 : index
    %340 = memref.load %arg2[%c39_83] : memref<54xf32, #tpu.memory_space<smem>>
    %341 = vector.broadcast %340 : f32 to vector<18x128xf32>
    %342 = arith.mulf %315, %341 : vector<18x128xf32>
    %343 = arith.addf %305, %342 : vector<18x128xf32>
    %c40_84 = arith.constant 40 : index
    %344 = memref.load %arg2[%c40_84] : memref<54xf32, #tpu.memory_space<smem>>
    %345 = vector.broadcast %344 : f32 to vector<18x128xf32>
    %346 = arith.mulf %315, %345 : vector<18x128xf32>
    %347 = arith.addf %309, %346 : vector<18x128xf32>
    %c41_85 = arith.constant 41 : index
    %348 = memref.load %arg2[%c41_85] : memref<54xf32, #tpu.memory_space<smem>>
    %349 = vector.broadcast %348 : f32 to vector<18x128xf32>
    %350 = arith.mulf %315, %349 : vector<18x128xf32>
    %351 = arith.addf %313, %350 : vector<18x128xf32>
    %c1_86 = arith.constant 1 : index
    %c0_87 = arith.constant 0 : index
    %c2_88 = arith.constant 2 : index
    %c0_89 = arith.constant 0 : index
    %352 = vector.load %arg1[%c1_86, %c0_87, %c2_88, %c0_89] : memref<2x2x20x128xf32, #tpu.memory_space<vmem>>, vector<1x1x18x128xf32>
    %353 = vector.shape_cast %352 : vector<1x1x18x128xf32> to vector<18x128xf32>
    %c6_90 = arith.constant 6 : index
    %354 = memref.load %arg2[%c6_90] : memref<54xf32, #tpu.memory_space<smem>>
    %355 = vector.broadcast %354 : f32 to vector<18x128xf32>
    %356 = arith.mulf %353, %355 : vector<18x128xf32>
    %357 = arith.addf %319, %356 : vector<18x128xf32>
    %c7_91 = arith.constant 7 : index
    %358 = memref.load %arg2[%c7_91] : memref<54xf32, #tpu.memory_space<smem>>
    %359 = vector.broadcast %358 : f32 to vector<18x128xf32>
    %360 = arith.mulf %353, %359 : vector<18x128xf32>
    %361 = arith.addf %323, %360 : vector<18x128xf32>
    %c8_92 = arith.constant 8 : index
    %362 = memref.load %arg2[%c8_92] : memref<54xf32, #tpu.memory_space<smem>>
    %363 = vector.broadcast %362 : f32 to vector<18x128xf32>
    %364 = arith.mulf %353, %363 : vector<18x128xf32>
    %365 = arith.addf %327, %364 : vector<18x128xf32>
    %c24_93 = arith.constant 24 : index
    %366 = memref.load %arg2[%c24_93] : memref<54xf32, #tpu.memory_space<smem>>
    %367 = vector.broadcast %366 : f32 to vector<18x128xf32>
    %368 = arith.mulf %353, %367 : vector<18x128xf32>
    %369 = arith.addf %331, %368 : vector<18x128xf32>
    %c25_94 = arith.constant 25 : index
    %370 = memref.load %arg2[%c25_94] : memref<54xf32, #tpu.memory_space<smem>>
    %371 = vector.broadcast %370 : f32 to vector<18x128xf32>
    %372 = arith.mulf %353, %371 : vector<18x128xf32>
    %373 = arith.addf %335, %372 : vector<18x128xf32>
    %c26_95 = arith.constant 26 : index
    %374 = memref.load %arg2[%c26_95] : memref<54xf32, #tpu.memory_space<smem>>
    %375 = vector.broadcast %374 : f32 to vector<18x128xf32>
    %376 = arith.mulf %353, %375 : vector<18x128xf32>
    %377 = arith.addf %339, %376 : vector<18x128xf32>
    %c42_96 = arith.constant 42 : index
    %378 = memref.load %arg2[%c42_96] : memref<54xf32, #tpu.memory_space<smem>>
    %379 = vector.broadcast %378 : f32 to vector<18x128xf32>
    %380 = arith.mulf %353, %379 : vector<18x128xf32>
    %381 = arith.addf %343, %380 : vector<18x128xf32>
    %c43_97 = arith.constant 43 : index
    %382 = memref.load %arg2[%c43_97] : memref<54xf32, #tpu.memory_space<smem>>
    %383 = vector.broadcast %382 : f32 to vector<18x128xf32>
    %384 = arith.mulf %353, %383 : vector<18x128xf32>
    %385 = arith.addf %347, %384 : vector<18x128xf32>
    %c44_98 = arith.constant 44 : index
    %386 = memref.load %arg2[%c44_98] : memref<54xf32, #tpu.memory_space<smem>>
    %387 = vector.broadcast %386 : f32 to vector<18x128xf32>
    %388 = arith.mulf %353, %387 : vector<18x128xf32>
    %389 = arith.addf %351, %388 : vector<18x128xf32>
    %c1_99 = arith.constant 1 : index
    %c1_100 = arith.constant 1 : index
    %c0_101 = arith.constant 0 : index
    %c0_102 = arith.constant 0 : index
    %390 = vector.load %arg1[%c1_99, %c1_100, %c0_101, %c0_102] : memref<2x2x20x128xf32, #tpu.memory_space<vmem>>, vector<1x1x18x128xf32>
    %391 = vector.shape_cast %390 : vector<1x1x18x128xf32> to vector<18x128xf32>
    %c9_103 = arith.constant 9 : index
    %392 = memref.load %arg2[%c9_103] : memref<54xf32, #tpu.memory_space<smem>>
    %393 = vector.broadcast %392 : f32 to vector<18x128xf32>
    %394 = arith.mulf %391, %393 : vector<18x128xf32>
    %395 = arith.addf %357, %394 : vector<18x128xf32>
    %c10_104 = arith.constant 10 : index
    %396 = memref.load %arg2[%c10_104] : memref<54xf32, #tpu.memory_space<smem>>
    %397 = vector.broadcast %396 : f32 to vector<18x128xf32>
    %398 = arith.mulf %391, %397 : vector<18x128xf32>
    %399 = arith.addf %361, %398 : vector<18x128xf32>
    %c11_105 = arith.constant 11 : index
    %400 = memref.load %arg2[%c11_105] : memref<54xf32, #tpu.memory_space<smem>>
    %401 = vector.broadcast %400 : f32 to vector<18x128xf32>
    %402 = arith.mulf %391, %401 : vector<18x128xf32>
    %403 = arith.addf %365, %402 : vector<18x128xf32>
    %c27_106 = arith.constant 27 : index
    %404 = memref.load %arg2[%c27_106] : memref<54xf32, #tpu.memory_space<smem>>
    %405 = vector.broadcast %404 : f32 to vector<18x128xf32>
    %406 = arith.mulf %391, %405 : vector<18x128xf32>
    %407 = arith.addf %369, %406 : vector<18x128xf32>
    %c28_107 = arith.constant 28 : index
    %408 = memref.load %arg2[%c28_107] : memref<54xf32, #tpu.memory_space<smem>>
    %409 = vector.broadcast %408 : f32 to vector<18x128xf32>
    %410 = arith.mulf %391, %409 : vector<18x128xf32>
    %411 = arith.addf %373, %410 : vector<18x128xf32>
    %c29_108 = arith.constant 29 : index
    %412 = memref.load %arg2[%c29_108] : memref<54xf32, #tpu.memory_space<smem>>
    %413 = vector.broadcast %412 : f32 to vector<18x128xf32>
    %414 = arith.mulf %391, %413 : vector<18x128xf32>
    %415 = arith.addf %377, %414 : vector<18x128xf32>
    %c45_109 = arith.constant 45 : index
    %416 = memref.load %arg2[%c45_109] : memref<54xf32, #tpu.memory_space<smem>>
    %417 = vector.broadcast %416 : f32 to vector<18x128xf32>
    %418 = arith.mulf %391, %417 : vector<18x128xf32>
    %419 = arith.addf %381, %418 : vector<18x128xf32>
    %c46_110 = arith.constant 46 : index
    %420 = memref.load %arg2[%c46_110] : memref<54xf32, #tpu.memory_space<smem>>
    %421 = vector.broadcast %420 : f32 to vector<18x128xf32>
    %422 = arith.mulf %391, %421 : vector<18x128xf32>
    %423 = arith.addf %385, %422 : vector<18x128xf32>
    %c47_111 = arith.constant 47 : index
    %424 = memref.load %arg2[%c47_111] : memref<54xf32, #tpu.memory_space<smem>>
    %425 = vector.broadcast %424 : f32 to vector<18x128xf32>
    %426 = arith.mulf %391, %425 : vector<18x128xf32>
    %427 = arith.addf %389, %426 : vector<18x128xf32>
    %c1_112 = arith.constant 1 : index
    %c1_113 = arith.constant 1 : index
    %c1_114 = arith.constant 1 : index
    %c0_115 = arith.constant 0 : index
    %428 = vector.load %arg1[%c1_112, %c1_113, %c1_114, %c0_115] : memref<2x2x20x128xf32, #tpu.memory_space<vmem>>, vector<1x1x18x128xf32>
    %429 = vector.shape_cast %428 : vector<1x1x18x128xf32> to vector<18x128xf32>
    %c12_116 = arith.constant 12 : index
    %430 = memref.load %arg2[%c12_116] : memref<54xf32, #tpu.memory_space<smem>>
    %431 = vector.broadcast %430 : f32 to vector<18x128xf32>
    %432 = arith.mulf %429, %431 : vector<18x128xf32>
    %433 = arith.addf %395, %432 : vector<18x128xf32>
    %c13_117 = arith.constant 13 : index
    %434 = memref.load %arg2[%c13_117] : memref<54xf32, #tpu.memory_space<smem>>
    %435 = vector.broadcast %434 : f32 to vector<18x128xf32>
    %436 = arith.mulf %429, %435 : vector<18x128xf32>
    %437 = arith.addf %399, %436 : vector<18x128xf32>
    %c14_118 = arith.constant 14 : index
    %438 = memref.load %arg2[%c14_118] : memref<54xf32, #tpu.memory_space<smem>>
    %439 = vector.broadcast %438 : f32 to vector<18x128xf32>
    %440 = arith.mulf %429, %439 : vector<18x128xf32>
    %441 = arith.addf %403, %440 : vector<18x128xf32>
    %c30_119 = arith.constant 30 : index
    %442 = memref.load %arg2[%c30_119] : memref<54xf32, #tpu.memory_space<smem>>
    %443 = vector.broadcast %442 : f32 to vector<18x128xf32>
    %444 = arith.mulf %429, %443 : vector<18x128xf32>
    %445 = arith.addf %407, %444 : vector<18x128xf32>
    %c31_120 = arith.constant 31 : index
    %446 = memref.load %arg2[%c31_120] : memref<54xf32, #tpu.memory_space<smem>>
    %447 = vector.broadcast %446 : f32 to vector<18x128xf32>
    %448 = arith.mulf %429, %447 : vector<18x128xf32>
    %449 = arith.addf %411, %448 : vector<18x128xf32>
    %c32_121 = arith.constant 32 : index
    %450 = memref.load %arg2[%c32_121] : memref<54xf32, #tpu.memory_space<smem>>
    %451 = vector.broadcast %450 : f32 to vector<18x128xf32>
    %452 = arith.mulf %429, %451 : vector<18x128xf32>
    %453 = arith.addf %415, %452 : vector<18x128xf32>
    %c48_122 = arith.constant 48 : index
    %454 = memref.load %arg2[%c48_122] : memref<54xf32, #tpu.memory_space<smem>>
    %455 = vector.broadcast %454 : f32 to vector<18x128xf32>
    %456 = arith.mulf %429, %455 : vector<18x128xf32>
    %457 = arith.addf %419, %456 : vector<18x128xf32>
    %c49_123 = arith.constant 49 : index
    %458 = memref.load %arg2[%c49_123] : memref<54xf32, #tpu.memory_space<smem>>
    %459 = vector.broadcast %458 : f32 to vector<18x128xf32>
    %460 = arith.mulf %429, %459 : vector<18x128xf32>
    %461 = arith.addf %423, %460 : vector<18x128xf32>
    %c50_124 = arith.constant 50 : index
    %462 = memref.load %arg2[%c50_124] : memref<54xf32, #tpu.memory_space<smem>>
    %463 = vector.broadcast %462 : f32 to vector<18x128xf32>
    %464 = arith.mulf %429, %463 : vector<18x128xf32>
    %465 = arith.addf %427, %464 : vector<18x128xf32>
    %c1_125 = arith.constant 1 : index
    %c1_126 = arith.constant 1 : index
    %c2_127 = arith.constant 2 : index
    %c0_128 = arith.constant 0 : index
    %466 = vector.load %arg1[%c1_125, %c1_126, %c2_127, %c0_128] : memref<2x2x20x128xf32, #tpu.memory_space<vmem>>, vector<1x1x18x128xf32>
    %467 = vector.shape_cast %466 : vector<1x1x18x128xf32> to vector<18x128xf32>
    %c15_129 = arith.constant 15 : index
    %468 = memref.load %arg2[%c15_129] : memref<54xf32, #tpu.memory_space<smem>>
    %469 = vector.broadcast %468 : f32 to vector<18x128xf32>
    %470 = arith.mulf %467, %469 : vector<18x128xf32>
    %471 = arith.addf %433, %470 : vector<18x128xf32>
    %c16_130 = arith.constant 16 : index
    %472 = memref.load %arg2[%c16_130] : memref<54xf32, #tpu.memory_space<smem>>
    %473 = vector.broadcast %472 : f32 to vector<18x128xf32>
    %474 = arith.mulf %467, %473 : vector<18x128xf32>
    %475 = arith.addf %437, %474 : vector<18x128xf32>
    %c17_131 = arith.constant 17 : index
    %476 = memref.load %arg2[%c17_131] : memref<54xf32, #tpu.memory_space<smem>>
    %477 = vector.broadcast %476 : f32 to vector<18x128xf32>
    %478 = arith.mulf %467, %477 : vector<18x128xf32>
    %479 = arith.addf %441, %478 : vector<18x128xf32>
    %c33_132 = arith.constant 33 : index
    %480 = memref.load %arg2[%c33_132] : memref<54xf32, #tpu.memory_space<smem>>
    %481 = vector.broadcast %480 : f32 to vector<18x128xf32>
    %482 = arith.mulf %467, %481 : vector<18x128xf32>
    %483 = arith.addf %445, %482 : vector<18x128xf32>
    %c34_133 = arith.constant 34 : index
    %484 = memref.load %arg2[%c34_133] : memref<54xf32, #tpu.memory_space<smem>>
    %485 = vector.broadcast %484 : f32 to vector<18x128xf32>
    %486 = arith.mulf %467, %485 : vector<18x128xf32>
    %487 = arith.addf %449, %486 : vector<18x128xf32>
    %c35_134 = arith.constant 35 : index
    %488 = memref.load %arg2[%c35_134] : memref<54xf32, #tpu.memory_space<smem>>
    %489 = vector.broadcast %488 : f32 to vector<18x128xf32>
    %490 = arith.mulf %467, %489 : vector<18x128xf32>
    %491 = arith.addf %453, %490 : vector<18x128xf32>
    %c51_135 = arith.constant 51 : index
    %492 = memref.load %arg2[%c51_135] : memref<54xf32, #tpu.memory_space<smem>>
    %493 = vector.broadcast %492 : f32 to vector<18x128xf32>
    %494 = arith.mulf %467, %493 : vector<18x128xf32>
    %495 = arith.addf %457, %494 : vector<18x128xf32>
    %c52_136 = arith.constant 52 : index
    %496 = memref.load %arg2[%c52_136] : memref<54xf32, #tpu.memory_space<smem>>
    %497 = vector.broadcast %496 : f32 to vector<18x128xf32>
    %498 = arith.mulf %467, %497 : vector<18x128xf32>
    %499 = arith.addf %461, %498 : vector<18x128xf32>
    %c53_137 = arith.constant 53 : index
    %500 = memref.load %arg2[%c53_137] : memref<54xf32, #tpu.memory_space<smem>>
    %501 = vector.broadcast %500 : f32 to vector<18x128xf32>
    %502 = arith.mulf %467, %501 : vector<18x128xf32>
    %503 = arith.addf %465, %502 : vector<18x128xf32>
    %c0_138 = arith.constant 0 : index
    %504 = memref.load %arg3[%c0_138] : memref<3xf32, #tpu.memory_space<smem>>
    %505 = vector.broadcast %504 : f32 to vector<18x128xf32>
    %506 = arith.addf %471, %505 : vector<18x128xf32>
    %c127_i32_139 = arith.constant 127 : i32
    %507 = tpu.dynamic_rotate %475 by %c127_i32_139 dim 1 : vector<18x128xf32>, i32 -> vector<18x128xf32>
    %508 = arith.addf %506, %507 : vector<18x128xf32>
    %c126_i32_140 = arith.constant 126 : i32
    %509 = tpu.dynamic_rotate %479 by %c126_i32_140 dim 1 : vector<18x128xf32>, i32 -> vector<18x128xf32>
    %510 = arith.addf %508, %509 : vector<18x128xf32>
    %c1_141 = arith.constant 1 : index
    %c0_142 = arith.constant 0 : index
    %c0_143 = arith.constant 0 : index
    %c0_144 = arith.constant 0 : index
    %511 = vector.load %arg4[%c1_141, %c0_142, %c0_143, %c0_144] : memref<2x3x18x128xf32, #tpu.memory_space<vmem>>, vector<1x1x18x128xf32>
    %512 = vector.shape_cast %511 : vector<1x1x18x128xf32> to vector<18x128xf32>
    %513 = vector.shape_cast %510 : vector<18x128xf32> to vector<1x1x18x128xf32>
    tpu.vector_store %arg4[%c1_141, %c0_142, %c0_143, %c0_144], %513 {strides = array<i32>} : memref<2x3x18x128xf32, #tpu.memory_space<vmem>>, vector<1x1x18x128xf32>,
    %c1_145 = arith.constant 1 : index
    %514 = memref.load %arg3[%c1_145] : memref<3xf32, #tpu.memory_space<smem>>
    %515 = vector.broadcast %514 : f32 to vector<18x128xf32>
    %516 = arith.addf %483, %515 : vector<18x128xf32>
    %c127_i32_146 = arith.constant 127 : i32
    %517 = tpu.dynamic_rotate %487 by %c127_i32_146 dim 1 : vector<18x128xf32>, i32 -> vector<18x128xf32>
    %518 = arith.addf %516, %517 : vector<18x128xf32>
    %c126_i32_147 = arith.constant 126 : i32
    %519 = tpu.dynamic_rotate %491 by %c126_i32_147 dim 1 : vector<18x128xf32>, i32 -> vector<18x128xf32>
    %520 = arith.addf %518, %519 : vector<18x128xf32>
    %c1_148 = arith.constant 1 : index
    %c1_149 = arith.constant 1 : index
    %c0_150 = arith.constant 0 : index
    %c0_151 = arith.constant 0 : index
    %521 = vector.load %arg4[%c1_148, %c1_149, %c0_150, %c0_151] : memref<2x3x18x128xf32, #tpu.memory_space<vmem>>, vector<1x1x18x128xf32>
    %522 = vector.shape_cast %521 : vector<1x1x18x128xf32> to vector<18x128xf32>
    %523 = vector.shape_cast %520 : vector<18x128xf32> to vector<1x1x18x128xf32>
    tpu.vector_store %arg4[%c1_148, %c1_149, %c0_150, %c0_151], %523 {strides = array<i32>} : memref<2x3x18x128xf32, #tpu.memory_space<vmem>>, vector<1x1x18x128xf32>,
    %c2_152 = arith.constant 2 : index
    %524 = memref.load %arg3[%c2_152] : memref<3xf32, #tpu.memory_space<smem>>
    %525 = vector.broadcast %524 : f32 to vector<18x128xf32>
    %526 = arith.addf %495, %525 : vector<18x128xf32>
    %c127_i32_153 = arith.constant 127 : i32
    %527 = tpu.dynamic_rotate %499 by %c127_i32_153 dim 1 : vector<18x128xf32>, i32 -> vector<18x128xf32>
    %528 = arith.addf %526, %527 : vector<18x128xf32>
    %c126_i32_154 = arith.constant 126 : i32
    %529 = tpu.dynamic_rotate %503 by %c126_i32_154 dim 1 : vector<18x128xf32>, i32 -> vector<18x128xf32>
    %530 = arith.addf %528, %529 : vector<18x128xf32>
    %c1_155 = arith.constant 1 : index
    %c2_156 = arith.constant 2 : index
    %c0_157 = arith.constant 0 : index
    %c0_158 = arith.constant 0 : index
    %531 = vector.load %arg4[%c1_155, %c2_156, %c0_157, %c0_158] : memref<2x3x18x128xf32, #tpu.memory_space<vmem>>, vector<1x1x18x128xf32>
    %532 = vector.shape_cast %531 : vector<1x1x18x128xf32> to vector<18x128xf32>
    %533 = vector.shape_cast %530 : vector<18x128xf32> to vector<1x1x18x128xf32>
    tpu.vector_store %arg4[%c1_155, %c2_156, %c0_157, %c0_158], %533 {strides = array<i32>} : memref<2x3x18x128xf32, #tpu.memory_space<vmem>>, vector<1x1x18x128xf32>,
    return
  }
  func.func @transform_0(%arg0: i32) -> (i32, i32, i32, i32) {
    %c0_i32 = arith.constant 0 : i32
    %c0_i32_0 = arith.constant 0 : i32
    %c0_i32_1 = arith.constant 0 : i32
    %c0_i32_2 = arith.constant 0 : i32
    return %arg0, %c0_i32, %c0_i32_0, %c0_i32_1 : i32, i32, i32, i32
  }
  func.func @transform_1(%arg0: i32) -> i32 {
    %c0_i32 = arith.constant 0 : i32
    %c0_i32_0 = arith.constant 0 : i32
    return %c0_i32 : i32
  }
  func.func @transform_2(%arg0: i32) -> i32 {
    %c0_i32 = arith.constant 0 : i32
    %c0_i32_0 = arith.constant 0 : i32
    return %c0_i32 : i32
  }
  func.func @transform_3(%arg0: i32) -> (i32, i32, i32, i32) {
    %c0_i32 = arith.constant 0 : i32
    %c0_i32_0 = arith.constant 0 : i32
    %c0_i32_1 = arith.constant 0 : i32
    %c0_i32_2 = arith.constant 0 : i32
    return %arg0, %c0_i32, %c0_i32_0, %c0_i32_1 : i32, i32, i32, i32
  }
}

</mosaic_0001>

<llo_original>
// kernel: tpu_custom_call.1
$region0: #{tpu_custom_call.1}
  #allocation0 [shape = 'u32[]', space=smem, size = 0x4, offset = 0x4, fixed_abs, tag = 'smem constant byte address 0x4 - core index']
  #allocation1 [shape = 'u32[144,128]{1,0:T(1,128)}', space=vmem, size = 0x12000, scoped, tag = 'internal scratch']
  %s0 = inlined_call_operand.vmem [shape: f32[4,2,20,128], index: 0, kind: input, shape index: {}]
  %s1 = inlined_call_operand.vmem [shape: f32[54], index: 1, kind: input, shape index: {}]
  %s2 = inlined_call_operand.vmem [shape: f32[3], index: 2, kind: input, shape index: {}]
  %s3 = inlined_call_operand.vmem [shape: f32[4,3,18,128], index: 3, kind: output, shape index: {}]
  %s4 = sld [smem:[#allocation0]]
  $region53: #{tpu_custom_call.1} parent=0
    _
  %s6 = ssub.s32 1, %s4
  %s7 = scalar_select 0, %s6, %s4
  $region1: #{tpu_custom_call.1} parent=0
    #allocation2 [shape = 'u8[512]{0}', space=smem, size = 0x200, scoped, tag = 'input window, operand 1, single buffered']
    #allocation3 [shape = 's32[2]{0}', space=sflag, size = 0x8, scoped, tag = 'scoped memory for tpu_custom_call.1']
    #allocation4 [shape = 'u8[512]{0}', space=smem, size = 0x200, scoped, tag = 'input window, operand 2, single buffered']
    #allocation5 [shape = 's32[1]{0}', space=sflag, size = 0x4, scoped, tag = 'scoped memory for tpu_custom_call.1']
    %8 = vsyncpa [#allocation3], 0
    %9 = vsyncpa [#allocation5], 0
    loop: start=0, step=1, limit=4
    $region2: #{tpu_custom_call.1} parent=1 // loop_pre_header
      _
    $region3: #{tpu_custom_call.1} parent=1 // loop_header
      %s11 = sphi 0, %s15
      %p12 = scmp.ge.s32.totalorder %s11, 4
      %s21 = sphi 0, %s23
      %s24 = sphi 0, %s21
      %s25 = sphi 0, %s24
      %s41 = sphi 0, %s25
      %s45 = sphi 0, %s45
      %s47 = sphi 0, %s45
      %s48 = sphi 0, %s47
      %s62 = sphi 0, %s48
      %s66 = sphi 0, %s66
      %s68 = sphi 0, %s66
      %s69 = sphi 0, %s68
      %s83 = sphi 0, %s69
      %s89 = sphi 0, %s91
      %s92 = sphi 0, %s89
      %s93 = sphi 0, %s92
      %s109 = sphi 0, %s93
    $region4: #{tpu_custom_call.1} parent=1 // loop_header_branch
      %14 = sbr.rel (%p12) target = $region8
    $region5: #{tpu_custom_call.1} parent=1 // loop_body
      %s16 = ssub.s32 %s11, 1
      %s17 = ssub.s32 %s11, 2
      %s18 = sadd.s32 %s11, 1
      %s19 = ssub.s32 %s11, %s18
      %p20 = scmp.eq.s32.totalorder %s19, 0
      %s22 = sadd.s32 %s21, 1
      %s23 = scalar_select %p20, %s21, %s22
      %p26 = pneg %p20
      %p27 = scmp.eq.s32.totalorder %s11, 1
      %p28 = por %p26, %p27
      %p29 = scmp.ne.s32.totalorder %s21, %s24
      %p30 = scmp.eq.s32.totalorder %s11, 0
      %p31 = por %p29, %p30
      %p32 = scmp.ne.s32.totalorder %s21, %s24
      %p33 = scmp.eq.s32.totalorder %s16, 1
      %p34 = por %p32, %p33
      %p35 = scmp.ne.s32.totalorder %s24, %s25
      %p36 = scmp.eq.s32.totalorder %s16, 0
      %p37 = por %p35, %p36
      %p38 = scmp.ne.s32.totalorder %s24, %s25
      %p39 = scmp.eq.s32.totalorder %s17, 1
      %p40 = por %p38, %p39
      %p42 = scmp.ne.s32.totalorder %s25, %s41
      %p43 = scmp.eq.s32.totalorder %s17, 0
      %p44 = por %p42, %p43
      %s46 = sadd.s32 %s45, 1
      %p49 = scmp.eq.s32.totalorder %s11, 1
      %p50 = scmp.ne.s32.totalorder %s45, %s47
      %p51 = scmp.eq.s32.totalorder %s11, 0
      %p52 = por %p50, %p51
      %p53 = scmp.ne.s32.totalorder %s45, %s47
      %p54 = scmp.eq.s32.totalorder %s16, 1
      %p55 = por %p53, %p54
      %p56 = scmp.ne.s32.totalorder %s47, %s48
      %p57 = scmp.eq.s32.totalorder %s16, 0
      %p58 = por %p56, %p57
      %p59 = scmp.ne.s32.totalorder %s47, %s48
      %p60 = scmp.eq.s32.totalorder %s17, 1
      %p61 = por %p59, %p60
      %p63 = scmp.ne.s32.totalorder %s48, %s62
      %p64 = scmp.eq.s32.totalorder %s17, 0
      %p65 = por %p63, %p64
      %s67 = sadd.s32 %s66, 1
      %p70 = scmp.eq.s32.totalorder %s11, 1
      %p71 = scmp.ne.s32.totalorder %s66, %s68
      %p72 = scmp.eq.s32.totalorder %s11, 0
      %p73 = por %p71, %p72
      %p74 = scmp.ne.s32.totalorder %s66, %s68
      %p75 = scmp.eq.s32.totalorder %s16, 1
      %p76 = por %p74, %p75
      %p77 = scmp.ne.s32.totalorder %s68, %s69
      %p78 = scmp.eq.s32.totalorder %s16, 0
      %p79 = por %p77, %p78
      %p80 = scmp.ne.s32.totalorder %s68, %s69
      %p81 = scmp.eq.s32.totalorder %s17, 1
      %p82 = por %p80, %p81
      %p84 = scmp.ne.s32.totalorder %s69, %s83
      %p85 = scmp.eq.s32.totalorder %s17, 0
      %p86 = por %p84, %p85
      %s87 = ssub.s32 %s11, %s18
      %p88 = scmp.eq.s32.totalorder %s87, 0
      %s90 = sadd.s32 %s89, 1
      %s91 = scalar_select %p88, %s89, %s90
      %p94 = pneg %p88
      %p95 = scmp.eq.s32.totalorder %s11, 1
      %p96 = por %p94, %p95
      %p97 = scmp.ne.s32.totalorder %s89, %s92
      %p98 = scmp.eq.s32.totalorder %s11, 0
      %p99 = por %p97, %p98
      %p100 = scmp.ne.s32.totalorder %s89, %s92
      %p101 = scmp.eq.s32.totalorder %s16, 1
      %p102 = por %p100, %p101
      %p103 = scmp.ne.s32.totalorder %s92, %s93
      %p104 = scmp.eq.s32.totalorder %s16, 0
      %p105 = por %p103, %p104
      %p106 = scmp.ne.s32.totalorder %s92, %s93
      %p107 = scmp.eq.s32.totalorder %s17, 1
      %p108 = por %p106, %p107
      %p110 = scmp.ne.s32.totalorder %s93, %s109
      %p111 = scmp.eq.s32.totalorder %s17, 0
      %p112 = por %p110, %p111
      %p113 = scmp.le.s32.totalorder 1, %s11
      %p114 = scmp.lt.s32.totalorder %s11, 3
      %p115 = pnand %p113, %p114
      %p116 = pneg %p115
      // Predicated region
      $region9: #{tpu_custom_call.1} parent=5 // pred_check
        _
      $region10: #{tpu_custom_call.1} parent=5 // pred_check_branch
        %118 = sbr.rel (%p115) target = $region12
      $region11: #{tpu_custom_call.1} parent=5 // pred_region
        %s119 = ssub.s32 %s11, 1
        // Predicated region
        $region13: #{tpu_custom_call.1} parent=11 // pred_check
          %p120 = pneg %p58
        $region14: #{tpu_custom_call.1} parent=11 // pred_check_branch
          %122 = sbr.rel (%p120) target = $region16
        $region15: #{tpu_custom_call.1} parent=11 // pred_region
          %s124 = ssub.s32 16, 16
          %125 = vsyncadd [#allocation3], %s124
          %s127 = sshll.u32 %s1, 4
          %s128 = int_to_ptr.vmem [resolvable:$true] %s127
          %130 = dma.vmem_to_smem %s128, 16, [#allocation2], [#allocation3]
        $region16: #{tpu_custom_call.1} parent=11 // pred_fallthru
          _
        // Predicated region
        $region17: #{tpu_custom_call.1} parent=11 // pred_check
          %p131 = pneg %p79
        $region18: #{tpu_custom_call.1} parent=11 // pred_check_branch
          %133 = sbr.rel (%p131) target = $region20
        $region19: #{tpu_custom_call.1} parent=11 // pred_region
          %s135 = ssub.s32 16, 16
          %136 = vsyncadd [#allocation5], %s135
          %s138 = sshll.u32 %s2, 4
          %s139 = int_to_ptr.vmem [resolvable:$true] %s138
          %141 = dma.vmem_to_smem %s139, 16, [#allocation4], [#allocation5]
        $region20: #{tpu_custom_call.1} parent=11 // pred_fallthru
          _
      $region12: #{tpu_custom_call.1} parent=5 // pred_fallthru
        _
      %p142 = scmp.lt.s32.totalorder %s11, 2
      // Predicated region
      $region21: #{tpu_custom_call.1} parent=5 // pred_check
        %p143 = pneg %p142
      $region22: #{tpu_custom_call.1} parent=5 // pred_check_branch
        %145 = sbr.rel (%p143) target = $region24
      $region23: #{tpu_custom_call.1} parent=5 // pred_region
        // Predicated region
        $region25: #{tpu_custom_call.1} parent=23 // pred_check
          %p146 = pneg %p31
        $region26: #{tpu_custom_call.1} parent=23 // pred_check_branch
          %148 = sbr.rel (%p146) target = $region28
        $region27: #{tpu_custom_call.1} parent=23 // pred_region
          %s149 = smul.u32 2, %s11
          %p150 = scmp.lt.s32.totalorder %s149, 3
          %s151 = scalar_select %p150, %s149, 3
          %s152 = smul.addr %s151, 6
          %s153 = smul.addr %s152, 8
          %s154 = scalar_lea.vmem %s0, %s153
          %s155 = smul.u32 2, %s11
        $region28: #{tpu_custom_call.1} parent=23 // pred_fallthru
          _
      $region24: #{tpu_custom_call.1} parent=5 // pred_fallthru
        _
      %p156 = scmp.le.s32.totalorder 1, %s11
      %p157 = scmp.lt.s32.totalorder %s11, 3
      %p158 = pnand %p156, %p157
      %p159 = pneg %p158
      // Predicated region
      $region29: #{tpu_custom_call.1} parent=5 // pred_check
        _
      $region30: #{tpu_custom_call.1} parent=5 // pred_check_branch
        %161 = sbr.rel (%p158) target = $region32
      $region31: #{tpu_custom_call.1} parent=5 // pred_region
        %s162 = ssub.s32 %s11, 1
        // Predicated region
        $region33: #{tpu_custom_call.1} parent=31 // pred_check
          %p163 = pneg %p58
        $region34: #{tpu_custom_call.1} parent=31 // pred_check_branch
          %165 = sbr.rel (%p163) target = $region36
        $region35: #{tpu_custom_call.1} parent=31 // pred_region
          %166 = dma.done [#allocation3], 16
        $region36: #{tpu_custom_call.1} parent=31 // pred_fallthru
          _
        // Predicated region
        $region37: #{tpu_custom_call.1} parent=31 // pred_check
          %p167 = pneg %p79
        $region38: #{tpu_custom_call.1} parent=31 // pred_check_branch
          %169 = sbr.rel (%p167) target = $region40
        $region39: #{tpu_custom_call.1} parent=31 // pred_region
          %170 = dma.done [#allocation5], 16
        $region40: #{tpu_custom_call.1} parent=31 // pred_fallthru
          _
        %171 = sfence
        %s172 = smul.u32 2, %s16
        %p173 = scmp.lt.s32.totalorder %s172, 3
        %s174 = scalar_select %p173, %s172, 3
        %s175 = smul.addr %s174, 6
        %s176 = smul.addr %s175, 8
        %s177 = scalar_lea.vmem %s0, %s176
        %p178 = pneg %p37
        %p179 = pneg %p34
        %p180 = pneg %p58
        %p181 = pneg %p55
        %p182 = pneg %p79
        %p183 = pneg %p76
        %p184 = pneg %p105
        %p185 = pneg %p102
        %s186 = smul.u32 2, %s16
        %p187 = scmp.lt.s32.totalorder %s186, 3
        %s188 = scalar_select %p187, %s186, 3
        %s189 = smul.addr %s188, 9
        %s190 = smul.addr %s189, 8
        %s191 = scalar_lea.vmem %s3, %s190
        %s192 = smul.u32 2, %s16
        %p193 = scmp.lt.s32.totalorder %s192, 3
        %s194 = scalar_select %p193, %s192, 3
        %s195 = smul.addr %s194, 6
        %s196 = smul.addr %s195, 8
        %s197 = scalar_lea.vmem %s0, %s196
        %s198 = smul.u32 2, %s16
        %s199 = smul.u32 2, %s16
        %p200 = scmp.lt.s32.totalorder %s199, 3
        %s201 = scalar_select %p200, %s199, 3
        %s202 = smul.addr %s201, 9
        %s203 = smul.addr %s202, 8
        %s204 = scalar_lea.vmem %s3, %s203
        %s205 = smul.u32 2, %s16
        %v206 = vld [vmem:[%s197] sm:$0xff]
        %v207 = vld [vmem:[%s197 + $0x8] sm:$0xff]
        %v208 = vld [vmem:[%s197 + $0x10] sm:$0x3]
        %s209 = sld [smem:[#allocation2]]
        %v210 = vstv %s209
        %v211 = vmul.f32 %v206, %v210
        %v212 = vmul.f32 %v207, %v210
        %v213 = vmul.f32 %v208, %v210
        %v214 = vadd.f32 %v211, 0.0
        %v215 = vadd.f32 %v212, 0.0
        %v216 = vadd.f32 %v213, 0.0
        %s217 = sld [smem:[#allocation2 + $0x1]]
        %v218 = vstv %s217
        %v219 = vmul.f32 %v206, %v218
        %v220 = vmul.f32 %v207, %v218
        %v221 = vmul.f32 %v208, %v218
        %v222 = vadd.f32 %v219, 0.0
        %v223 = vadd.f32 %v220, 0.0
        %v224 = vadd.f32 %v221, 0.0
        %s225 = sld [smem:[#allocation2 + $0x2]]
        %v226 = vstv %s225
        %v227 = vmul.f32 %v206, %v226
        %v228 = vmul.f32 %v207, %v226
        %v229 = vmul.f32 %v208, %v226
        %v230 = vadd.f32 %v227, 0.0
        %v231 = vadd.f32 %v228, 0.0
        %v232 = vadd.f32 %v229, 0.0
        %s233 = sld [smem:[#allocation2 + $0x12]]
        %v234 = vstv %s233
        %v235 = vmul.f32 %v206, %v234
        %v236 = vmul.f32 %v207, %v234
        %v237 = vmul.f32 %v208, %v234
        %v238 = vadd.f32 %v235, 0.0
        %v239 = vadd.f32 %v236, 0.0
        %v240 = vadd.f32 %v237, 0.0
        %s241 = sld [smem:[#allocation2 + $0x13]]
        %v242 = vstv %s241
        %v243 = vmul.f32 %v206, %v242
        %v244 = vmul.f32 %v207, %v242
        %v245 = vmul.f32 %v208, %v242
        %v246 = vadd.f32 %v243, 0.0
        %v247 = vadd.f32 %v244, 0.0
        %v248 = vadd.f32 %v245, 0.0
        %s249 = sld [smem:[#allocation2 + $0x14]]
        %v250 = vstv %s249
        %v251 = vmul.f32 %v206, %v250
        %v252 = vmul.f32 %v207, %v250
        %v253 = vmul.f32 %v208, %v250
        %v254 = vadd.f32 %v251, 0.0
        %v255 = vadd.f32 %v252, 0.0
        %v256 = vadd.f32 %v253, 0.0
        %s257 = sld [smem:[#allocation2 + $0x24]]
        %v258 = vstv %s257
        %v259 = vmul.f32 %v206, %v258
        %v260 = vmul.f32 %v207, %v258
        %v261 = vmul.f32 %v208, %v258
        %v262 = vadd.f32 %v259, 0.0
        %v263 = vadd.f32 %v260, 0.0
        %v264 = vadd.f32 %v261, 0.0
        %s265 = sld [smem:[#allocation2 + $0x25]]
        %v266 = vstv %s265
        %v267 = vmul.f32 %v206, %v266
        %v268 = vmul.f32 %v207, %v266
        %v269 = vmul.f32 %v208, %v266
        %v270 = vadd.f32 %v267, 0.0
        %v271 = vadd.f32 %v268, 0.0
        %v272 = vadd.f32 %v269, 0.0
        %s273 = sld [smem:[#allocation2 + $0x26]]
        %v274 = vstv %s273
        %v275 = vmul.f32 %v206, %v274
        %v276 = vmul.f32 %v207, %v274
        %v277 = vmul.f32 %v208, %v274
        %v278 = vadd.f32 %v275, 0.0
        %v279 = vadd.f32 %v276, 0.0
        %v280 = vadd.f32 %v277, 0.0
        %v281 = vld [vmem:[%s197 + $0x1] sm:$0xff]
        %v282 = vld [vmem:[%s197 + $0x9] sm:$0xff]
        %v283 = vld [vmem:[%s197 + $0x11] sm:$0x3]
        %s284 = sld [smem:[#allocation2 + $0x3]]
        %v285 = vstv %s284
        %v286 = vmul.f32 %v281, %v285
        %v287 = vmul.f32 %v282, %v285
        %v288 = vmul.f32 %v283, %v285
        %v289 = vadd.f32 %v214, %v286
        %v290 = vadd.f32 %v215, %v287
        %v291 = vadd.f32 %v216, %v288
        %s292 = sld [smem:[#allocation2 + $0x4]]
        %v293 = vstv %s292
        %v294 = vmul.f32 %v281, %v293
        %v295 = vmul.f32 %v282, %v293
        %v296 = vmul.f32 %v283, %v293
        %v297 = vadd.f32 %v222, %v294
        %v298 = vadd.f32 %v223, %v295
        %v299 = vadd.f32 %v224, %v296
        %s300 = sld [smem:[#allocation2 + $0x5]]
        %v301 = vstv %s300
        %v302 = vmul.f32 %v281, %v301
        %v303 = vmul.f32 %v282, %v301
        %v304 = vmul.f32 %v283, %v301
        %v305 = vadd.f32 %v230, %v302
        %v306 = vadd.f32 %v231, %v303
        %v307 = vadd.f32 %v232, %v304
        %s308 = sld [smem:[#allocation2 + $0x15]]
        %v309 = vstv %s308
        %v310 = vmul.f32 %v281, %v309
        %v311 = vmul.f32 %v282, %v309
        %v312 = vmul.f32 %v283, %v309
        %v313 = vadd.f32 %v238, %v310
        %v314 = vadd.f32 %v239, %v311
        %v315 = vadd.f32 %v240, %v312
        %s316 = sld [smem:[#allocation2 + $0x16]]
        %v317 = vstv %s316
        %v318 = vmul.f32 %v281, %v317
        %v319 = vmul.f32 %v282, %v317
        %v320 = vmul.f32 %v283, %v317
        %v321 = vadd.f32 %v246, %v318
        %v322 = vadd.f32 %v247, %v319
        %v323 = vadd.f32 %v248, %v320
        %s324 = sld [smem:[#allocation2 + $0x17]]
        %v325 = vstv %s324
        %v326 = vmul.f32 %v281, %v325
        %v327 = vmul.f32 %v282, %v325
        %v328 = vmul.f32 %v283, %v325
        %v329 = vadd.f32 %v254, %v326
        %v330 = vadd.f32 %v255, %v327
        %v331 = vadd.f32 %v256, %v328
        %s332 = sld [smem:[#allocation2 + $0x27]]
        %v333 = vstv %s332
        %v334 = vmul.f32 %v281, %v333
        %v335 = vmul.f32 %v282, %v333
        %v336 = vmul.f32 %v283, %v333
        %v337 = vadd.f32 %v262, %v334
        %v338 = vadd.f32 %v263, %v335
        %v339 = vadd.f32 %v264, %v336
        %s340 = sld [smem:[#allocation2 + $0x28]]
        %v341 = vstv %s340
        %v342 = vmul.f32 %v281, %v341
        %v343 = vmul.f32 %v282, %v341
        %v344 = vmul.f32 %v283, %v341
        %v345 = vadd.f32 %v270, %v342
        %v346 = vadd.f32 %v271, %v343
        %v347 = vadd.f32 %v272, %v344
        %s348 = sld [smem:[#allocation2 + $0x29]]
        %v349 = vstv %s348
        %v350 = vmul.f32 %v281, %v349
        %v351 = vmul.f32 %v282, %v349
        %v352 = vmul.f32 %v283, %v349
        %v353 = vadd.f32 %v278, %v350
        %v354 = vadd.f32 %v279, %v351
        %v355 = vadd.f32 %v280, %v352
        %v356 = vld [vmem:[%s197 + $0x2] sm:$0xff]
        %v357 = vld [vmem:[%s197 + $0xa] sm:$0xff]
        %v358 = vld [vmem:[%s197 + $0x12] sm:$0x3]
        %s359 = sld [smem:[#allocation2 + $0x6]]
        %v360 = vstv %s359
        %v361 = vmul.f32 %v356, %v360
        %v362 = vmul.f32 %v357, %v360
        %v363 = vmul.f32 %v358, %v360
        %v364 = vadd.f32 %v289, %v361
        %v365 = vadd.f32 %v290, %v362
        %v366 = vadd.f32 %v291, %v363
        %s367 = sld [smem:[#allocation2 + $0x7]]
        %v368 = vstv %s367
        %v369 = vmul.f32 %v356, %v368
        %v370 = vmul.f32 %v357, %v368
        %v371 = vmul.f32 %v358, %v368
        %v372 = vadd.f32 %v297, %v369
        %v373 = vadd.f32 %v298, %v370
        %v374 = vadd.f32 %v299, %v371
        %s375 = sld [smem:[#allocation2 + $0x8]]
        %v376 = vstv %s375
        %v377 = vmul.f32 %v356, %v376
        %v378 = vmul.f32 %v357, %v376
        %v379 = vmul.f32 %v358, %v376
        %v380 = vadd.f32 %v305, %v377
        %v381 = vadd.f32 %v306, %v378
        %v382 = vadd.f32 %v307, %v379
        %s383 = sld [smem:[#allocation2 + $0x18]]
        %v384 = vstv %s383
        %v385 = vmul.f32 %v356, %v384
        %v386 = vmul.f32 %v357, %v384
        %v387 = vmul.f32 %v358, %v384
        %v388 = vadd.f32 %v313, %v385
        %v389 = vadd.f32 %v314, %v386
        %v390 = vadd.f32 %v315, %v387
        %s391 = sld [smem:[#allocation2 + $0x19]]
        %v392 = vstv %s391
        %v393 = vmul.f32 %v356, %v392
        %v394 = vmul.f32 %v357, %v392
        %v395 = vmul.f32 %v358, %v392
        %v396 = vadd.f32 %v321, %v393
        %v397 = vadd.f32 %v322, %v394
        %v398 = vadd.f32 %v323, %v395
        %s399 = sld [smem:[#allocation2 + $0x1a]]
        %v400 = vstv %s399
        %v401 = vmul.f32 %v356, %v400
        %v402 = vmul.f32 %v357, %v400
        %v403 = vmul.f32 %v358, %v400
        %v404 = vadd.f32 %v329, %v401
        %v405 = vadd.f32 %v330, %v402
        %v406 = vadd.f32 %v331, %v403
        %s407 = sld [smem:[#allocation2 + $0x2a]]
        %v408 = vstv %s407
        %v409 = vmul.f32 %v356, %v408
        %v410 = vmul.f32 %v357, %v408
        %v411 = vmul.f32 %v358, %v408
        %v412 = vadd.f32 %v337, %v409
        %v413 = vadd.f32 %v338, %v410
        %v414 = vadd.f32 %v339, %v411
        %s415 = sld [smem:[#allocation2 + $0x2b]]
        %v416 = vstv %s415
        %v417 = vmul.f32 %v356, %v416
        %v418 = vmul.f32 %v357, %v416
        %v419 = vmul.f32 %v358, %v416
        %v420 = vadd.f32 %v345, %v417
        %v421 = vadd.f32 %v346, %v418
        %v422 = vadd.f32 %v347, %v419
        %s423 = sld [smem:[#allocation2 + $0x2c]]
        %v424 = vstv %s423
        %v425 = vmul.f32 %v356, %v424
        %v426 = vmul.f32 %v357, %v424
        %v427 = vmul.f32 %v358, %v424
        %v428 = vadd.f32 %v353, %v425
        %v429 = vadd.f32 %v354, %v426
        %v430 = vadd.f32 %v355, %v427
        %s431 = scalar_lea.vmem %s197, 24
        %v432 = vld [vmem:[%s431] sm:$0xff]
        %v433 = vld [vmem:[%s431 + $0x8] sm:$0xff]
        %v434 = vld [vmem:[%s431 + $0x10] sm:$0x3]
        %s435 = sld [smem:[#allocation2 + $0x9]]
        %v436 = vstv %s435
        %v437 = vmul.f32 %v432, %v436
        %v438 = vmul.f32 %v433, %v436
        %v439 = vmul.f32 %v434, %v436
        %v440 = vadd.f32 %v364, %v437
        %v441 = vadd.f32 %v365, %v438
        %v442 = vadd.f32 %v366, %v439
        %s443 = sld [smem:[#allocation2 + $0xa]]
        %v444 = vstv %s443
        %v445 = vmul.f32 %v432, %v444
        %v446 = vmul.f32 %v433, %v444
        %v447 = vmul.f32 %v434, %v444
        %v448 = vadd.f32 %v372, %v445
        %v449 = vadd.f32 %v373, %v446
        %v450 = vadd.f32 %v374, %v447
        %s451 = sld [smem:[#allocation2 + $0xb]]
        %v452 = vstv %s451
        %v453 = vmul.f32 %v432, %v452
        %v454 = vmul.f32 %v433, %v452
        %v455 = vmul.f32 %v434, %v452
        %v456 = vadd.f32 %v380, %v453
        %v457 = vadd.f32 %v381, %v454
        %v458 = vadd.f32 %v382, %v455
        %s459 = sld [smem:[#allocation2 + $0x1b]]
        %v460 = vstv %s459
        %v461 = vmul.f32 %v432, %v460
        %v462 = vmul.f32 %v433, %v460
        %v463 = vmul.f32 %v434, %v460
        %v464 = vadd.f32 %v388, %v461
        %v465 = vadd.f32 %v389, %v462
        %v466 = vadd.f32 %v390, %v463
        %s467 = sld [smem:[#allocation2 + $0x1c]]
        %v468 = vstv %s467
        %v469 = vmul.f32 %v432, %v468
        %v470 = vmul.f32 %v433, %v468
        %v471 = vmul.f32 %v434, %v468
        %v472 = vadd.f32 %v396, %v469
        %v473 = vadd.f32 %v397, %v470
        %v474 = vadd.f32 %v398, %v471
        %s475 = sld [smem:[#allocation2 + $0x1d]]
        %v476 = vstv %s475
        %v477 = vmul.f32 %v432, %v476
        %v478 = vmul.f32 %v433, %v476
        %v479 = vmul.f32 %v434, %v476
        %v480 = vadd.f32 %v404, %v477
        %v481 = vadd.f32 %v405, %v478
        %v482 = vadd.f32 %v406, %v479
        %s483 = sld [smem:[#allocation2 + $0x2d]]
        %v484 = vstv %s483
        %v485 = vmul.f32 %v432, %v484
        %v486 = vmul.f32 %v433, %v484
        %v487 = vmul.f32 %v434, %v484
        %v488 = vadd.f32 %v412, %v485
        %v489 = vadd.f32 %v413, %v486
        %v490 = vadd.f32 %v414, %v487
        %s491 = sld [smem:[#allocation2 + $0x2e]]
        %v492 = vstv %s491
        %v493 = vmul.f32 %v432, %v492
        %v494 = vmul.f32 %v433, %v492
        %v495 = vmul.f32 %v434, %v492
        %v496 = vadd.f32 %v420, %v493
        %v497 = vadd.f32 %v421, %v494
        %v498 = vadd.f32 %v422, %v495
        %s499 = sld [smem:[#allocation2 + $0x2f]]
        %v500 = vstv %s499
        %v501 = vmul.f32 %v432, %v500
        %v502 = vmul.f32 %v433, %v500
        %v503 = vmul.f32 %v434, %v500
        %v504 = vadd.f32 %v428, %v501
        %v505 = vadd.f32 %v429, %v502
        %v506 = vadd.f32 %v430, %v503
        %v507 = vld [vmem:[%s431 + $0x1] sm:$0xff]
        %v508 = vld [vmem:[%s431 + $0x9] sm:$0xff]
        %v509 = vld [vmem:[%s431 + $0x11] sm:$0x3]
        %s510 = sld [smem:[#allocation2 + $0xc]]
        %v511 = vstv %s510
        %v512 = vmul.f32 %v507, %v511
        %v513 = vmul.f32 %v508, %v511
        %v514 = vmul.f32 %v509, %v511
        %v515 = vadd.f32 %v440, %v512
        %v516 = vadd.f32 %v441, %v513
        %v517 = vadd.f32 %v442, %v514
        %s518 = sld [smem:[#allocation2 + $0xd]]
        %v519 = vstv %s518
        %v520 = vmul.f32 %v507, %v519
        %v521 = vmul.f32 %v508, %v519
        %v522 = vmul.f32 %v509, %v519
        %v523 = vadd.f32 %v448, %v520
        %v524 = vadd.f32 %v449, %v521
        %v525 = vadd.f32 %v450, %v522
        %s526 = sld [smem:[#allocation2 + $0xe]]
        %v527 = vstv %s526
        %v528 = vmul.f32 %v507, %v527
        %v529 = vmul.f32 %v508, %v527
        %v530 = vmul.f32 %v509, %v527
        %v531 = vadd.f32 %v456, %v528
        %v532 = vadd.f32 %v457, %v529
        %v533 = vadd.f32 %v458, %v530
        %s534 = sld [smem:[#allocation2 + $0x1e]]
        %v535 = vstv %s534
        %v536 = vmul.f32 %v507, %v535
        %v537 = vmul.f32 %v508, %v535
        %v538 = vmul.f32 %v509, %v535
        %v539 = vadd.f32 %v464, %v536
        %v540 = vadd.f32 %v465, %v537
        %v541 = vadd.f32 %v466, %v538
        %s542 = sld [smem:[#allocation2 + $0x1f]]
        %v543 = vstv %s542
        %v544 = vmul.f32 %v507, %v543
        %v545 = vmul.f32 %v508, %v543
        %v546 = vmul.f32 %v509, %v543
        %v547 = vadd.f32 %v472, %v544
        %v548 = vadd.f32 %v473, %v545
        %v549 = vadd.f32 %v474, %v546
        %s550 = sld [smem:[#allocation2 + $0x20]]
        %v551 = vstv %s550
        %v552 = vmul.f32 %v507, %v551
        %v553 = vmul.f32 %v508, %v551
        %v554 = vmul.f32 %v509, %v551
        %v555 = vadd.f32 %v480, %v552
        %v556 = vadd.f32 %v481, %v553
        %v557 = vadd.f32 %v482, %v554
        %s558 = sld [smem:[#allocation2 + $0x30]]
        %v559 = vstv %s558
        %v560 = vmul.f32 %v507, %v559
        %v561 = vmul.f32 %v508, %v559
        %v562 = vmul.f32 %v509, %v559
        %v563 = vadd.f32 %v488, %v560
        %v564 = vadd.f32 %v489, %v561
        %v565 = vadd.f32 %v490, %v562
        %s566 = sld [smem:[#allocation2 + $0x31]]
        %v567 = vstv %s566
        %v568 = vmul.f32 %v507, %v567
        %v569 = vmul.f32 %v508, %v567
        %v570 = vmul.f32 %v509, %v567
        %v571 = vadd.f32 %v496, %v568
        %v572 = vadd.f32 %v497, %v569
        %v573 = vadd.f32 %v498, %v570
        %s574 = sld [smem:[#allocation2 + $0x32]]
        %v575 = vstv %s574
        %v576 = vmul.f32 %v507, %v575
        %v577 = vmul.f32 %v508, %v575
        %v578 = vmul.f32 %v509, %v575
        %v579 = vadd.f32 %v504, %v576
        %v580 = vadd.f32 %v505, %v577
        %v581 = vadd.f32 %v506, %v578
        %v582 = vld [vmem:[%s431 + $0x2] sm:$0xff]
        %v583 = vld [vmem:[%s431 + $0xa] sm:$0xff]
        %v584 = vld [vmem:[%s431 + $0x12] sm:$0x3]
        %s585 = sld [smem:[#allocation2 + $0xf]]
        %v586 = vstv %s585
        %v587 = vmul.f32 %v582, %v586
        %v588 = vmul.f32 %v583, %v586
        %v589 = vmul.f32 %v584, %v586
        %v590 = vadd.f32 %v515, %v587
        %v591 = vadd.f32 %v516, %v588
        %v592 = vadd.f32 %v517, %v589
        %s593 = sld [smem:[#allocation2 + $0x10]]
        %v594 = vstv %s593
        %v595 = vmul.f32 %v582, %v594
        %v596 = vmul.f32 %v583, %v594
        %v597 = vmul.f32 %v584, %v594
        %v598 = vadd.f32 %v523, %v595
        %v599 = vadd.f32 %v524, %v596
        %v600 = vadd.f32 %v525, %v597
        %s601 = sld [smem:[#allocation2 + $0x11]]
        %v602 = vstv %s601
        %v603 = vmul.f32 %v582, %v602
        %v604 = vmul.f32 %v583, %v602
        %v605 = vmul.f32 %v584, %v602
        %v606 = vadd.f32 %v531, %v603
        %v607 = vadd.f32 %v532, %v604
        %v608 = vadd.f32 %v533, %v605
        %s609 = sld [smem:[#allocation2 + $0x21]]
        %v610 = vstv %s609
        %v611 = vmul.f32 %v582, %v610
        %v612 = vmul.f32 %v583, %v610
        %v613 = vmul.f32 %v584, %v610
        %v614 = vadd.f32 %v539, %v611
        %v615 = vadd.f32 %v540, %v612
        %v616 = vadd.f32 %v541, %v613
        %s617 = sld [smem:[#allocation2 + $0x22]]
        %v618 = vstv %s617
        %v619 = vmul.f32 %v582, %v618
        %v620 = vmul.f32 %v583, %v618
        %v621 = vmul.f32 %v584, %v618
        %v622 = vadd.f32 %v547, %v619
        %v623 = vadd.f32 %v548, %v620
        %v624 = vadd.f32 %v549, %v621
        %s625 = sld [smem:[#allocation2 + $0x23]]
        %v626 = vstv %s625
        %v627 = vmul.f32 %v582, %v626
        %v628 = vmul.f32 %v583, %v626
        %v629 = vmul.f32 %v584, %v626
        %v630 = vadd.f32 %v555, %v627
        %v631 = vadd.f32 %v556, %v628
        %v632 = vadd.f32 %v557, %v629
        %s633 = sld [smem:[#allocation2 + $0x33]]
        %v634 = vstv %s633
        %v635 = vmul.f32 %v582, %v634
        %v636 = vmul.f32 %v583, %v634
        %v637 = vmul.f32 %v584, %v634
        %v638 = vadd.f32 %v563, %v635
        %v639 = vadd.f32 %v564, %v636
        %v640 = vadd.f32 %v565, %v637
        %s641 = sld [smem:[#allocation2 + $0x34]]
        %v642 = vstv %s641
        %v643 = vmul.f32 %v582, %v642
        %v644 = vmul.f32 %v583, %v642
        %v645 = vmul.f32 %v584, %v642
        %v646 = vadd.f32 %v571, %v643
        %v647 = vadd.f32 %v572, %v644
        %v648 = vadd.f32 %v573, %v645
        %s649 = sld [smem:[#allocation2 + $0x35]]
        %v650 = vstv %s649
        %v651 = vmul.f32 %v582, %v650
        %v652 = vmul.f32 %v583, %v650
        %v653 = vmul.f32 %v584, %v650
        %v654 = vadd.f32 %v579, %v651
        %v655 = vadd.f32 %v580, %v652
        %v656 = vadd.f32 %v581, %v653
        %s657 = sld [smem:[#allocation4]]
        %v658 = vstv %s657
        %v659 = vadd.f32 %v590, %v658
        %v660 = vadd.f32 %v591, %v658
        %v661 = vadd.f32 %v592, %v658
        %662 = vrot.lane.b32.xlu0 %v598, 127
        %v663 = vpop.permute.xlu0 %662
        %664 = vrot.lane.b32.xlu0 %v599, 127
        %v665 = vpop.permute.xlu0 %664
        %666 = vrot.lane.b32.xlu0 %v600, 127
        %v667 = vpop.permute.xlu0 %666
        %v668 = vadd.f32 %v659, %v663
        %v669 = vadd.f32 %v660, %v665
        %v670 = vadd.f32 %v661, %v667
        %671 = vrot.lane.b32.xlu0 %v606, 126
        %v672 = vpop.permute.xlu0 %671
        %673 = vrot.lane.b32.xlu0 %v607, 126
        %v674 = vpop.permute.xlu0 %673
        %675 = vrot.lane.b32.xlu0 %v608, 126
        %v676 = vpop.permute.xlu0 %675
        %v677 = vadd.f32 %v668, %v672
        %v678 = vadd.f32 %v669, %v674
        %v679 = vadd.f32 %v670, %v676
        %680 = vst [vmem:[%s204] sm:$0xff] %v677
        %681 = vst [vmem:[%s204 + $0x8] sm:$0xff] %v678
        %682 = vst [vmem:[%s204 + $0x10] sm:$0x3] %v679
        %s683 = sld [smem:[#allocation4 + $0x1]]
        %v684 = vstv %s683
        %v685 = vadd.f32 %v614, %v684
        %v686 = vadd.f32 %v615, %v684
        %v687 = vadd.f32 %v616, %v684
        %688 = vrot.lane.b32.xlu0 %v622, 127
        %v689 = vpop.permute.xlu0 %688
        %690 = vrot.lane.b32.xlu0 %v623, 127
        %v691 = vpop.permute.xlu0 %690
        %692 = vrot.lane.b32.xlu0 %v624, 127
        %v693 = vpop.permute.xlu0 %692
        %v694 = vadd.f32 %v685, %v689
        %v695 = vadd.f32 %v686, %v691
        %v696 = vadd.f32 %v687, %v693
        %697 = vrot.lane.b32.xlu0 %v630, 126
        %v698 = vpop.permute.xlu0 %697
        %699 = vrot.lane.b32.xlu0 %v631, 126
        %v700 = vpop.permute.xlu0 %699
        %701 = vrot.lane.b32.xlu0 %v632, 126
        %v702 = vpop.permute.xlu0 %701
        %v703 = vadd.f32 %v694, %v698
        %v704 = vadd.f32 %v695, %v700
        %v705 = vadd.f32 %v696, %v702
        %s706 = scalar_lea.vmem %s204, 24
        %707 = vst [vmem:[%s706] sm:$0xff] %v703
        %708 = vst [vmem:[%s706 + $0x8] sm:$0xff] %v704
        %709 = vst [vmem:[%s706 + $0x10] sm:$0x3] %v705
        %s710 = sld [smem:[#allocation4 + $0x2]]
        %v711 = vstv %s710
        %v712 = vadd.f32 %v638, %v711
        %v713 = vadd.f32 %v639, %v711
        %v714 = vadd.f32 %v640, %v711
        %715 = vrot.lane.b32.xlu0 %v646, 127
        %v716 = vpop.permute.xlu0 %715
        %717 = vrot.lane.b32.xlu0 %v647, 127
        %v718 = vpop.permute.xlu0 %717
        %719 = vrot.lane.b32.xlu0 %v648, 127
        %v720 = vpop.permute.xlu0 %719
        %v721 = vadd.f32 %v712, %v716
        %v722 = vadd.f32 %v713, %v718
        %v723 = vadd.f32 %v714, %v720
        %724 = vrot.lane.b32.xlu0 %v654, 126
        %v725 = vpop.permute.xlu0 %724
        %726 = vrot.lane.b32.xlu0 %v655, 126
        %v727 = vpop.permute.xlu0 %726
        %728 = vrot.lane.b32.xlu0 %v656, 126
        %v729 = vpop.permute.xlu0 %728
        %v730 = vadd.f32 %v721, %v725
        %v731 = vadd.f32 %v722, %v727
        %v732 = vadd.f32 %v723, %v729
        %s733 = scalar_lea.vmem %s204, 48
        %734 = vst [vmem:[%s733] sm:$0xff] %v730
        %735 = vst [vmem:[%s733 + $0x8] sm:$0xff] %v731
        %736 = vst [vmem:[%s733 + $0x10] sm:$0x3] %v732
        %s737 = scalar_lea.vmem %s197, 48
        %v738 = vld [vmem:[%s737] sm:$0xff]
        %v739 = vld [vmem:[%s737 + $0x8] sm:$0xff]
        %v740 = vld [vmem:[%s737 + $0x10] sm:$0x3]
        %s741 = sld [smem:[#allocation2]]
        %v742 = vstv %s741
        %v743 = vmul.f32 %v738, %v742
        %v744 = vmul.f32 %v739, %v742
        %v745 = vmul.f32 %v740, %v742
        %v746 = vadd.f32 %v743, 0.0
        %v747 = vadd.f32 %v744, 0.0
        %v748 = vadd.f32 %v745, 0.0
        %s749 = sld [smem:[#allocation2 + $0x1]]
        %v750 = vstv %s749
        %v751 = vmul.f32 %v738, %v750
        %v752 = vmul.f32 %v739, %v750
        %v753 = vmul.f32 %v740, %v750
        %v754 = vadd.f32 %v751, 0.0
        %v755 = vadd.f32 %v752, 0.0
        %v756 = vadd.f32 %v753, 0.0
        %s757 = sld [smem:[#allocation2 + $0x2]]
        %v758 = vstv %s757
        %v759 = vmul.f32 %v738, %v758
        %v760 = vmul.f32 %v739, %v758
        %v761 = vmul.f32 %v740, %v758
        %v762 = vadd.f32 %v759, 0.0
        %v763 = vadd.f32 %v760, 0.0
        %v764 = vadd.f32 %v761, 0.0
        %s765 = sld [smem:[#allocation2 + $0x12]]
        %v766 = vstv %s765
        %v767 = vmul.f32 %v738, %v766
        %v768 = vmul.f32 %v739, %v766
        %v769 = vmul.f32 %v740, %v766
        %v770 = vadd.f32 %v767, 0.0
        %v771 = vadd.f32 %v768, 0.0
        %v772 = vadd.f32 %v769, 0.0
        %s773 = sld [smem:[#allocation2 + $0x13]]
        %v774 = vstv %s773
        %v775 = vmul.f32 %v738, %v774
        %v776 = vmul.f32 %v739, %v774
        %v777 = vmul.f32 %v740, %v774
        %v778 = vadd.f32 %v775, 0.0
        %v779 = vadd.f32 %v776, 0.0
        %v780 = vadd.f32 %v777, 0.0
        %s781 = sld [smem:[#allocation2 + $0x14]]
        %v782 = vstv %s781
        %v783 = vmul.f32 %v738, %v782
        %v784 = vmul.f32 %v739, %v782
        %v785 = vmul.f32 %v740, %v782
        %v786 = vadd.f32 %v783, 0.0
        %v787 = vadd.f32 %v784, 0.0
        %v788 = vadd.f32 %v785, 0.0
        %s789 = sld [smem:[#allocation2 + $0x24]]
        %v790 = vstv %s789
        %v791 = vmul.f32 %v738, %v790
        %v792 = vmul.f32 %v739, %v790
        %v793 = vmul.f32 %v740, %v790
        %v794 = vadd.f32 %v791, 0.0
        %v795 = vadd.f32 %v792, 0.0
        %v796 = vadd.f32 %v793, 0.0
        %s797 = sld [smem:[#allocation2 + $0x25]]
        %v798 = vstv %s797
        %v799 = vmul.f32 %v738, %v798
        %v800 = vmul.f32 %v739, %v798
        %v801 = vmul.f32 %v740, %v798
        %v802 = vadd.f32 %v799, 0.0
        %v803 = vadd.f32 %v800, 0.0
        %v804 = vadd.f32 %v801, 0.0
        %s805 = sld [smem:[#allocation2 + $0x26]]
        %v806 = vstv %s805
        %v807 = vmul.f32 %v738, %v806
        %v808 = vmul.f32 %v739, %v806
        %v809 = vmul.f32 %v740, %v806
        %v810 = vadd.f32 %v807, 0.0
        %v811 = vadd.f32 %v808, 0.0
        %v812 = vadd.f32 %v809, 0.0
        %v813 = vld [vmem:[%s737 + $0x1] sm:$0xff]
        %v814 = vld [vmem:[%s737 + $0x9] sm:$0xff]
        %v815 = vld [vmem:[%s737 + $0x11] sm:$0x3]
        %s816 = sld [smem:[#allocation2 + $0x3]]
        %v817 = vstv %s816
        %v818 = vmul.f32 %v813, %v817
        %v819 = vmul.f32 %v814, %v817
        %v820 = vmul.f32 %v815, %v817
        %v821 = vadd.f32 %v746, %v818
        %v822 = vadd.f32 %v747, %v819
        %v823 = vadd.f32 %v748, %v820
        %s824 = sld [smem:[#allocation2 + $0x4]]
        %v825 = vstv %s824
        %v826 = vmul.f32 %v813, %v825
        %v827 = vmul.f32 %v814, %v825
        %v828 = vmul.f32 %v815, %v825
        %v829 = vadd.f32 %v754, %v826
        %v830 = vadd.f32 %v755, %v827
        %v831 = vadd.f32 %v756, %v828
        %s832 = sld [smem:[#allocation2 + $0x5]]
        %v833 = vstv %s832
        %v834 = vmul.f32 %v813, %v833
        %v835 = vmul.f32 %v814, %v833
        %v836 = vmul.f32 %v815, %v833
        %v837 = vadd.f32 %v762, %v834
        %v838 = vadd.f32 %v763, %v835
        %v839 = vadd.f32 %v764, %v836
        %s840 = sld [smem:[#allocation2 + $0x15]]
        %v841 = vstv %s840
        %v842 = vmul.f32 %v813, %v841
        %v843 = vmul.f32 %v814, %v841
        %v844 = vmul.f32 %v815, %v841
        %v845 = vadd.f32 %v770, %v842
        %v846 = vadd.f32 %v771, %v843
        %v847 = vadd.f32 %v772, %v844
        %s848 = sld [smem:[#allocation2 + $0x16]]
        %v849 = vstv %s848
        %v850 = vmul.f32 %v813, %v849
        %v851 = vmul.f32 %v814, %v849
        %v852 = vmul.f32 %v815, %v849
        %v853 = vadd.f32 %v778, %v850
        %v854 = vadd.f32 %v779, %v851
        %v855 = vadd.f32 %v780, %v852
        %s856 = sld [smem:[#allocation2 + $0x17]]
        %v857 = vstv %s856
        %v858 = vmul.f32 %v813, %v857
        %v859 = vmul.f32 %v814, %v857
        %v860 = vmul.f32 %v815, %v857
        %v861 = vadd.f32 %v786, %v858
        %v862 = vadd.f32 %v787, %v859
        %v863 = vadd.f32 %v788, %v860
        %s864 = sld [smem:[#allocation2 + $0x27]]
        %v865 = vstv %s864
        %v866 = vmul.f32 %v813, %v865
        %v867 = vmul.f32 %v814, %v865
        %v868 = vmul.f32 %v815, %v865
        %v869 = vadd.f32 %v794, %v866
        %v870 = vadd.f32 %v795, %v867
        %v871 = vadd.f32 %v796, %v868
        %s872 = sld [smem:[#allocation2 + $0x28]]
        %v873 = vstv %s872
        %v874 = vmul.f32 %v813, %v873
        %v875 = vmul.f32 %v814, %v873
        %v876 = vmul.f32 %v815, %v873
        %v877 = vadd.f32 %v802, %v874
        %v878 = vadd.f32 %v803, %v875
        %v879 = vadd.f32 %v804, %v876
        %s880 = sld [smem:[#allocation2 + $0x29]]
        %v881 = vstv %s880
        %v882 = vmul.f32 %v813, %v881
        %v883 = vmul.f32 %v814, %v881
        %v884 = vmul.f32 %v815, %v881
        %v885 = vadd.f32 %v810, %v882
        %v886 = vadd.f32 %v811, %v883
        %v887 = vadd.f32 %v812, %v884
        %v888 = vld [vmem:[%s737 + $0x2] sm:$0xff]
        %v889 = vld [vmem:[%s737 + $0xa] sm:$0xff]
        %v890 = vld [vmem:[%s737 + $0x12] sm:$0x3]
        %s891 = sld [smem:[#allocation2 + $0x6]]
        %v892 = vstv %s891
        %v893 = vmul.f32 %v888, %v892
        %v894 = vmul.f32 %v889, %v892
        %v895 = vmul.f32 %v890, %v892
        %v896 = vadd.f32 %v821, %v893
        %v897 = vadd.f32 %v822, %v894
        %v898 = vadd.f32 %v823, %v895
        %s899 = sld [smem:[#allocation2 + $0x7]]
        %v900 = vstv %s899
        %v901 = vmul.f32 %v888, %v900
        %v902 = vmul.f32 %v889, %v900
        %v903 = vmul.f32 %v890, %v900
        %v904 = vadd.f32 %v829, %v901
        %v905 = vadd.f32 %v830, %v902
        %v906 = vadd.f32 %v831, %v903
        %s907 = sld [smem:[#allocation2 + $0x8]]
        %v908 = vstv %s907
        %v909 = vmul.f32 %v888, %v908
        %v910 = vmul.f32 %v889, %v908
        %v911 = vmul.f32 %v890, %v908
        %v912 = vadd.f32 %v837, %v909
        %v913 = vadd.f32 %v838, %v910
        %v914 = vadd.f32 %v839, %v911
        %s915 = sld [smem:[#allocation2 + $0x18]]
        %v916 = vstv %s915
        %v917 = vmul.f32 %v888, %v916
        %v918 = vmul.f32 %v889, %v916
        %v919 = vmul.f32 %v890, %v916
        %v920 = vadd.f32 %v845, %v917
        %v921 = vadd.f32 %v846, %v918
        %v922 = vadd.f32 %v847, %v919
        %s923 = sld [smem:[#allocation2 + $0x19]]
        %v924 = vstv %s923
        %v925 = vmul.f32 %v888, %v924
        %v926 = vmul.f32 %v889, %v924
        %v927 = vmul.f32 %v890, %v924
        %v928 = vadd.f32 %v853, %v925
        %v929 = vadd.f32 %v854, %v926
        %v930 = vadd.f32 %v855, %v927
        %s931 = sld [smem:[#allocation2 + $0x1a]]
        %v932 = vstv %s931
        %v933 = vmul.f32 %v888, %v932
        %v934 = vmul.f32 %v889, %v932
        %v935 = vmul.f32 %v890, %v932
        %v936 = vadd.f32 %v861, %v933
        %v937 = vadd.f32 %v862, %v934
        %v938 = vadd.f32 %v863, %v935
        %s939 = sld [smem:[#allocation2 + $0x2a]]
        %v940 = vstv %s939
        %v941 = vmul.f32 %v888, %v940
        %v942 = vmul.f32 %v889, %v940
        %v943 = vmul.f32 %v890, %v940
        %v944 = vadd.f32 %v869, %v941
        %v945 = vadd.f32 %v870, %v942
        %v946 = vadd.f32 %v871, %v943
        %s947 = sld [smem:[#allocation2 + $0x2b]]
        %v948 = vstv %s947
        %v949 = vmul.f32 %v888, %v948
        %v950 = vmul.f32 %v889, %v948
        %v951 = vmul.f32 %v890, %v948
        %v952 = vadd.f32 %v877, %v949
        %v953 = vadd.f32 %v878, %v950
        %v954 = vadd.f32 %v879, %v951
        %s955 = sld [smem:[#allocation2 + $0x2c]]
        %v956 = vstv %s955
        %v957 = vmul.f32 %v888, %v956
        %v958 = vmul.f32 %v889, %v956
        %v959 = vmul.f32 %v890, %v956
        %v960 = vadd.f32 %v885, %v957
        %v961 = vadd.f32 %v886, %v958
        %v962 = vadd.f32 %v887, %v959
        %s963 = scalar_lea.vmem %s197, 72
        %v964 = vld [vmem:[%s963] sm:$0xff]
        %v965 = vld [vmem:[%s963 + $0x8] sm:$0xff]
        %v966 = vld [vmem:[%s963 + $0x10] sm:$0x3]
        %s967 = sld [smem:[#allocation2 + $0x9]]
        %v968 = vstv %s967
        %v969 = vmul.f32 %v964, %v968
        %v970 = vmul.f32 %v965, %v968
        %v971 = vmul.f32 %v966, %v968
        %v972 = vadd.f32 %v896, %v969
        %v973 = vadd.f32 %v897, %v970
        %v974 = vadd.f32 %v898, %v971
        %s975 = sld [smem:[#allocation2 + $0xa]]
        %v976 = vstv %s975
        %v977 = vmul.f32 %v964, %v976
        %v978 = vmul.f32 %v965, %v976
        %v979 = vmul.f32 %v966, %v976
        %v980 = vadd.f32 %v904, %v977
        %v981 = vadd.f32 %v905, %v978
        %v982 = vadd.f32 %v906, %v979
        %s983 = sld [smem:[#allocation2 + $0xb]]
        %v984 = vstv %s983
        %v985 = vmul.f32 %v964, %v984
        %v986 = vmul.f32 %v965, %v984
        %v987 = vmul.f32 %v966, %v984
        %v988 = vadd.f32 %v912, %v985
        %v989 = vadd.f32 %v913, %v986
        %v990 = vadd.f32 %v914, %v987
        %s991 = sld [smem:[#allocation2 + $0x1b]]
        %v992 = vstv %s991
        %v993 = vmul.f32 %v964, %v992
        %v994 = vmul.f32 %v965, %v992
        %v995 = vmul.f32 %v966, %v992
        %v996 = vadd.f32 %v920, %v993
        %v997 = vadd.f32 %v921, %v994
        %v998 = vadd.f32 %v922, %v995
        %s999 = sld [smem:[#allocation2 + $0x1c]]
        %v1000 = vstv %s999
        %v1001 = vmul.f32 %v964, %v1000
        %v1002 = vmul.f32 %v965, %v1000
        %v1003 = vmul.f32 %v966, %v1000
        %v1004 = vadd.f32 %v928, %v1001
        %v1005 = vadd.f32 %v929, %v1002
        %v1006 = vadd.f32 %v930, %v1003
        %s1007 = sld [smem:[#allocation2 + $0x1d]]
        %v1008 = vstv %s1007
        %v1009 = vmul.f32 %v964, %v1008
        %v1010 = vmul.f32 %v965, %v1008
        %v1011 = vmul.f32 %v966, %v1008
        %v1012 = vadd.f32 %v936, %v1009
        %v1013 = vadd.f32 %v937, %v1010
        %v1014 = vadd.f32 %v938, %v1011
        %s1015 = sld [smem:[#allocation2 + $0x2d]]
        %v1016 = vstv %s1015
        %v1017 = vmul.f32 %v964, %v1016
        %v1018 = vmul.f32 %v965, %v1016
        %v1019 = vmul.f32 %v966, %v1016
        %v1020 = vadd.f32 %v944, %v1017
        %v1021 = vadd.f32 %v945, %v1018
        %v1022 = vadd.f32 %v946, %v1019
        %s1023 = sld [smem:[#allocation2 + $0x2e]]
        %v1024 = vstv %s1023
        %v1025 = vmul.f32 %v964, %v1024
        %v1026 = vmul.f32 %v965, %v1024
        %v1027 = vmul.f32 %v966, %v1024
        %v1028 = vadd.f32 %v952, %v1025
        %v1029 = vadd.f32 %v953, %v1026
        %v1030 = vadd.f32 %v954, %v1027
        %s1031 = sld [smem:[#allocation2 + $0x2f]]
        %v1032 = vstv %s1031
        %v1033 = vmul.f32 %v964, %v1032
        %v1034 = vmul.f32 %v965, %v1032
        %v1035 = vmul.f32 %v966, %v1032
        %v1036 = vadd.f32 %v960, %v1033
        %v1037 = vadd.f32 %v961, %v1034
        %v1038 = vadd.f32 %v962, %v1035
        %v1039 = vld [vmem:[%s963 + $0x1] sm:$0xff]
        %v1040 = vld [vmem:[%s963 + $0x9] sm:$0xff]
        %v1041 = vld [vmem:[%s963 + $0x11] sm:$0x3]
        %s1042 = sld [smem:[#allocation2 + $0xc]]
        %v1043 = vstv %s1042
        %v1044 = vmul.f32 %v1039, %v1043
        %v1045 = vmul.f32 %v1040, %v1043
        %v1046 = vmul.f32 %v1041, %v1043
        %v1047 = vadd.f32 %v972, %v1044
        %v1048 = vadd.f32 %v973, %v1045
        %v1049 = vadd.f32 %v974, %v1046
        %s1050 = sld [smem:[#allocation2 + $0xd]]
        %v1051 = vstv %s1050
        %v1052 = vmul.f32 %v1039, %v1051
        %v1053 = vmul.f32 %v1040, %v1051
        %v1054 = vmul.f32 %v1041, %v1051
        %v1055 = vadd.f32 %v980, %v1052
        %v1056 = vadd.f32 %v981, %v1053
        %v1057 = vadd.f32 %v982, %v1054
        %s1058 = sld [smem:[#allocation2 + $0xe]]
        %v1059 = vstv %s1058
        %v1060 = vmul.f32 %v1039, %v1059
        %v1061 = vmul.f32 %v1040, %v1059
        %v1062 = vmul.f32 %v1041, %v1059
        %v1063 = vadd.f32 %v988, %v1060
        %v1064 = vadd.f32 %v989, %v1061
        %v1065 = vadd.f32 %v990, %v1062
        %s1066 = sld [smem:[#allocation2 + $0x1e]]
        %v1067 = vstv %s1066
        %v1068 = vmul.f32 %v1039, %v1067
        %v1069 = vmul.f32 %v1040, %v1067
        %v1070 = vmul.f32 %v1041, %v1067
        %v1071 = vadd.f32 %v996, %v1068
        %v1072 = vadd.f32 %v997, %v1069
        %v1073 = vadd.f32 %v998, %v1070
        %s1074 = sld [smem:[#allocation2 + $0x1f]]
        %v1075 = vstv %s1074
        %v1076 = vmul.f32 %v1039, %v1075
        %v1077 = vmul.f32 %v1040, %v1075
        %v1078 = vmul.f32 %v1041, %v1075
        %v1079 = vadd.f32 %v1004, %v1076
        %v1080 = vadd.f32 %v1005, %v1077
        %v1081 = vadd.f32 %v1006, %v1078
        %s1082 = sld [smem:[#allocation2 + $0x20]]
        %v1083 = vstv %s1082
        %v1084 = vmul.f32 %v1039, %v1083
        %v1085 = vmul.f32 %v1040, %v1083
        %v1086 = vmul.f32 %v1041, %v1083
        %v1087 = vadd.f32 %v1012, %v1084
        %v1088 = vadd.f32 %v1013, %v1085
        %v1089 = vadd.f32 %v1014, %v1086
        %s1090 = sld [smem:[#allocation2 + $0x30]]
        %v1091 = vstv %s1090
        %v1092 = vmul.f32 %v1039, %v1091
        %v1093 = vmul.f32 %v1040, %v1091
        %v1094 = vmul.f32 %v1041, %v1091
        %v1095 = vadd.f32 %v1020, %v1092
        %v1096 = vadd.f32 %v1021, %v1093
        %v1097 = vadd.f32 %v1022, %v1094
        %s1098 = sld [smem:[#allocation2 + $0x31]]
        %v1099 = vstv %s1098
        %v1100 = vmul.f32 %v1039, %v1099
        %v1101 = vmul.f32 %v1040, %v1099
        %v1102 = vmul.f32 %v1041, %v1099
        %v1103 = vadd.f32 %v1028, %v1100
        %v1104 = vadd.f32 %v1029, %v1101
        %v1105 = vadd.f32 %v1030, %v1102
        %s1106 = sld [smem:[#allocation2 + $0x32]]
        %v1107 = vstv %s1106
        %v1108 = vmul.f32 %v1039, %v1107
        %v1109 = vmul.f32 %v1040, %v1107
        %v1110 = vmul.f32 %v1041, %v1107
        %v1111 = vadd.f32 %v1036, %v1108
        %v1112 = vadd.f32 %v1037, %v1109
        %v1113 = vadd.f32 %v1038, %v1110
        %v1114 = vld [vmem:[%s963 + $0x2] sm:$0xff]
        %v1115 = vld [vmem:[%s963 + $0xa] sm:$0xff]
        %v1116 = vld [vmem:[%s963 + $0x12] sm:$0x3]
        %s1117 = sld [smem:[#allocation2 + $0xf]]
        %v1118 = vstv %s1117
        %v1119 = vmul.f32 %v1114, %v1118
        %v1120 = vmul.f32 %v1115, %v1118
        %v1121 = vmul.f32 %v1116, %v1118
        %v1122 = vadd.f32 %v1047, %v1119
        %v1123 = vadd.f32 %v1048, %v1120
        %v1124 = vadd.f32 %v1049, %v1121
        %s1125 = sld [smem:[#allocation2 + $0x10]]
        %v1126 = vstv %s1125
        %v1127 = vmul.f32 %v1114, %v1126
        %v1128 = vmul.f32 %v1115, %v1126
        %v1129 = vmul.f32 %v1116, %v1126
        %v1130 = vadd.f32 %v1055, %v1127
        %v1131 = vadd.f32 %v1056, %v1128
        %v1132 = vadd.f32 %v1057, %v1129
        %s1133 = sld [smem:[#allocation2 + $0x11]]
        %v1134 = vstv %s1133
        %v1135 = vmul.f32 %v1114, %v1134
        %v1136 = vmul.f32 %v1115, %v1134
        %v1137 = vmul.f32 %v1116, %v1134
        %v1138 = vadd.f32 %v1063, %v1135
        %v1139 = vadd.f32 %v1064, %v1136
        %v1140 = vadd.f32 %v1065, %v1137
        %s1141 = sld [smem:[#allocation2 + $0x21]]
        %v1142 = vstv %s1141
        %v1143 = vmul.f32 %v1114, %v1142
        %v1144 = vmul.f32 %v1115, %v1142
        %v1145 = vmul.f32 %v1116, %v1142
        %v1146 = vadd.f32 %v1071, %v1143
        %v1147 = vadd.f32 %v1072, %v1144
        %v1148 = vadd.f32 %v1073, %v1145
        %s1149 = sld [smem:[#allocation2 + $0x22]]
        %v1150 = vstv %s1149
        %v1151 = vmul.f32 %v1114, %v1150
        %v1152 = vmul.f32 %v1115, %v1150
        %v1153 = vmul.f32 %v1116, %v1150
        %v1154 = vadd.f32 %v1079, %v1151
        %v1155 = vadd.f32 %v1080, %v1152
        %v1156 = vadd.f32 %v1081, %v1153
        %s1157 = sld [smem:[#allocation2 + $0x23]]
        %v1158 = vstv %s1157
        %v1159 = vmul.f32 %v1114, %v1158
        %v1160 = vmul.f32 %v1115, %v1158
        %v1161 = vmul.f32 %v1116, %v1158
        %v1162 = vadd.f32 %v1087, %v1159
        %v1163 = vadd.f32 %v1088, %v1160
        %v1164 = vadd.f32 %v1089, %v1161
        %s1165 = sld [smem:[#allocation2 + $0x33]]
        %v1166 = vstv %s1165
        %v1167 = vmul.f32 %v1114, %v1166
        %v1168 = vmul.f32 %v1115, %v1166
        %v1169 = vmul.f32 %v1116, %v1166
        %v1170 = vadd.f32 %v1095, %v1167
        %v1171 = vadd.f32 %v1096, %v1168
        %v1172 = vadd.f32 %v1097, %v1169
        %s1173 = sld [smem:[#allocation2 + $0x34]]
        %v1174 = vstv %s1173
        %v1175 = vmul.f32 %v1114, %v1174
        %v1176 = vmul.f32 %v1115, %v1174
        %v1177 = vmul.f32 %v1116, %v1174
        %v1178 = vadd.f32 %v1103, %v1175
        %v1179 = vadd.f32 %v1104, %v1176
        %v1180 = vadd.f32 %v1105, %v1177
        %s1181 = sld [smem:[#allocation2 + $0x35]]
        %v1182 = vstv %s1181
        %v1183 = vmul.f32 %v1114, %v1182
        %v1184 = vmul.f32 %v1115, %v1182
        %v1185 = vmul.f32 %v1116, %v1182
        %v1186 = vadd.f32 %v1111, %v1183
        %v1187 = vadd.f32 %v1112, %v1184
        %v1188 = vadd.f32 %v1113, %v1185
        %s1189 = sld [smem:[#allocation4]]
        %v1190 = vstv %s1189
        %v1191 = vadd.f32 %v1122, %v1190
        %v1192 = vadd.f32 %v1123, %v1190
        %v1193 = vadd.f32 %v1124, %v1190
        %1194 = vrot.lane.b32.xlu0 %v1130, 127
        %v1195 = vpop.permute.xlu0 %1194
        %1196 = vrot.lane.b32.xlu0 %v1131, 127
        %v1197 = vpop.permute.xlu0 %1196
        %1198 = vrot.lane.b32.xlu0 %v1132, 127
        %v1199 = vpop.permute.xlu0 %1198
        %v1200 = vadd.f32 %v1191, %v1195
        %v1201 = vadd.f32 %v1192, %v1197
        %v1202 = vadd.f32 %v1193, %v1199
        %1203 = vrot.lane.b32.xlu0 %v1138, 126
        %v1204 = vpop.permute.xlu0 %1203
        %1205 = vrot.lane.b32.xlu0 %v1139, 126
        %v1206 = vpop.permute.xlu0 %1205
        %1207 = vrot.lane.b32.xlu0 %v1140, 126
        %v1208 = vpop.permute.xlu0 %1207
        %v1209 = vadd.f32 %v1200, %v1204
        %v1210 = vadd.f32 %v1201, %v1206
        %v1211 = vadd.f32 %v1202, %v1208
        %s1212 = scalar_lea.vmem %s204, 72
        %1213 = vst [vmem:[%s1212] sm:$0xff] %v1209
        %1214 = vst [vmem:[%s1212 + $0x8] sm:$0xff] %v1210
        %1215 = vst [vmem:[%s1212 + $0x10] sm:$0x3] %v1211
        %s1216 = sld [smem:[#allocation4 + $0x1]]
        %v1217 = vstv %s1216
        %v1218 = vadd.f32 %v1146, %v1217
        %v1219 = vadd.f32 %v1147, %v1217
        %v1220 = vadd.f32 %v1148, %v1217
        %1221 = vrot.lane.b32.xlu0 %v1154, 127
        %v1222 = vpop.permute.xlu0 %1221
        %1223 = vrot.lane.b32.xlu0 %v1155, 127
        %v1224 = vpop.permute.xlu0 %1223
        %1225 = vrot.lane.b32.xlu0 %v1156, 127
        %v1226 = vpop.permute.xlu0 %1225
        %v1227 = vadd.f32 %v1218, %v1222
        %v1228 = vadd.f32 %v1219, %v1224
        %v1229 = vadd.f32 %v1220, %v1226
        %1230 = vrot.lane.b32.xlu0 %v1162, 126
        %v1231 = vpop.permute.xlu0 %1230
        %1232 = vrot.lane.b32.xlu0 %v1163, 126
        %v1233 = vpop.permute.xlu0 %1232
        %1234 = vrot.lane.b32.xlu0 %v1164, 126
        %v1235 = vpop.permute.xlu0 %1234
        %v1236 = vadd.f32 %v1227, %v1231
        %v1237 = vadd.f32 %v1228, %v1233
        %v1238 = vadd.f32 %v1229, %v1235
        %s1239 = scalar_lea.vmem %s204, 96
        %1240 = vst [vmem:[%s1239] sm:$0xff] %v1236
        %1241 = vst [vmem:[%s1239 + $0x8] sm:$0xff] %v1237
        %1242 = vst [vmem:[%s1239 + $0x10] sm:$0x3] %v1238
        %s1243 = sld [smem:[#allocation4 + $0x2]]
        %v1244 = vstv %s1243
        %v1245 = vadd.f32 %v1170, %v1244
        %v1246 = vadd.f32 %v1171, %v1244
        %v1247 = vadd.f32 %v1172, %v1244
        %1248 = vrot.lane.b32.xlu0 %v1178, 127
        %v1249 = vpop.permute.xlu0 %1248
        %1250 = vrot.lane.b32.xlu0 %v1179, 127
        %v1251 = vpop.permute.xlu0 %1250
        %1252 = vrot.lane.b32.xlu0 %v1180, 127
        %v1253 = vpop.permute.xlu0 %1252
        %v1254 = vadd.f32 %v1245, %v1249
        %v1255 = vadd.f32 %v1246, %v1251
        %v1256 = vadd.f32 %v1247, %v1253
        %1257 = vrot.lane.b32.xlu0 %v1186, 126
        %v1258 = vpop.permute.xlu0 %1257
        %1259 = vrot.lane.b32.xlu0 %v1187, 126
        %v1260 = vpop.permute.xlu0 %1259
        %1261 = vrot.lane.b32.xlu0 %v1188, 126
        %v1262 = vpop.permute.xlu0 %1261
        %v1263 = vadd.f32 %v1254, %v1258
        %v1264 = vadd.f32 %v1255, %v1260
        %v1265 = vadd.f32 %v1256, %v1262
        %s1266 = scalar_lea.vmem %s204, 120
        %1267 = vst [vmem:[%s1266] sm:$0xff] %v1263
        %1268 = vst [vmem:[%s1266 + $0x8] sm:$0xff] %v1264
        %1269 = vst [vmem:[%s1266 + $0x10] sm:$0x3] %v1265
        %s1270 = smul.u32 2, %s16
        %p1271 = scmp.lt.s32.totalorder %s1270, 3
        %s1272 = scalar_select %p1271, %s1270, 3
        %s1273 = smul.addr %s1272, 9
        %s1274 = smul.addr %s1273, 8
        %s1275 = scalar_lea.vmem %s3, %s1274
        // Predicated region
        $region41: #{tpu_custom_call.1} parent=31 // pred_check
          %p1276 = pneg %p102
        $region42: #{tpu_custom_call.1} parent=31 // pred_check_branch
          %1278 = sbr.rel (%p1276) target = $region44
        $region43: #{tpu_custom_call.1} parent=31 // pred_region
          %s1279 = smul.u32 2, %s16
        $region44: #{tpu_custom_call.1} parent=31 // pred_fallthru
          _
      $region32: #{tpu_custom_call.1} parent=5 // pred_fallthru
        _
      %p1280 = scmp.le.s32.totalorder 2, %s11
      // Predicated region
      $region45: #{tpu_custom_call.1} parent=5 // pred_check
        %p1281 = pneg %p1280
      $region46: #{tpu_custom_call.1} parent=5 // pred_check_branch
        %1283 = sbr.rel (%p1281) target = $region48
      $region47: #{tpu_custom_call.1} parent=5 // pred_region
        %s1284 = ssub.s32 %s11, 2
        // Predicated region
        $region49: #{tpu_custom_call.1} parent=47 // pred_check
          %p1285 = pneg %p108
        $region50: #{tpu_custom_call.1} parent=47 // pred_check_branch
          %1287 = sbr.rel (%p1285) target = $region52
        $region51: #{tpu_custom_call.1} parent=47 // pred_region
          %s1288 = smul.u32 2, %s17
          %p1289 = scmp.lt.s32.totalorder %s1288, 3
          %s1290 = scalar_select %p1289, %s1288, 3
          %s1291 = smul.addr %s1290, 9
          %s1292 = smul.addr %s1291, 8
          %s1293 = scalar_lea.vmem %s3, %s1292
        $region52: #{tpu_custom_call.1} parent=47 // pred_fallthru
          _
      $region48: #{tpu_custom_call.1} parent=5 // pred_fallthru
        _
    $region6: #{tpu_custom_call.1} parent=1 // loop_footer
      %s15 = sadd.s32 1, %s11
    $region7: #{tpu_custom_call.1} parent=1 // loop_footer_branch
      %10 = sbr.rel target = $region3
    $region8: #{tpu_custom_call.1} parent=1 // loop_exit
      _
    %1294 = vsyncpa [#allocation3], 1
    %s1295 = scalar_lea.sflag [#allocation3], 1
    %1296 = vsyncpa %s1295, 1
    %1297 = vsyncpa [#allocation5], 1

</llo_original>
